<compile_context>
chip_gen: v7x
topology: tpu7x:2x2x1
jax: 0.10.0
libtpu: 0.0.40
codegen_flags: <defaults>
</compile_context>

<pallas_src>
import jax
import jax.numpy as jnp
import numpy as np
from jax.experimental import pallas as pl
from jax.experimental.pallas import tpu as pltpu

NEG_SLOPE = 0.01   # nn.LeakyReLU default
BN_EPS = 1e-5      # nn.BatchNorm3d default


def _conv_relu_pool_stats_kernel(x_ref, w_ref, b_ref, yp_ref, sum_ref, sq_ref):
    """1x1x1 conv (bf16 MXU matmul, f32 acc) + LeakyReLU + per-channel sum/sumsq
    + 2x2x2 average pool (every 8 consecutive rows of the block = one window)."""
    i = pl.program_id(1)   # inner ("arbitrary") reduction axis

    y = jnp.dot(x_ref[...], w_ref[...], preferred_element_type=jnp.float32)
    y = y + b_ref[...]
    y = jnp.where(y >= 0, y, NEG_SLOPE * y)          # LeakyReLU

    # BN-statistics accumulators (resident output blocks, one per parallel split).
    @pl.when(i == 0)
    def _():
        sum_ref[...] = jnp.zeros_like(sum_ref)
        sq_ref[...] = jnp.zeros_like(sq_ref)

    sum_ref[...] += jnp.sum(y, axis=0, keepdims=True)
    sq_ref[...] += jnp.sum(y * y, axis=0, keepdims=True)

    # AvgPool3d(2,2): rows already grouped so 8 consecutive rows = one window.
    tm, cout = y.shape
    yp = jnp.sum(y.reshape(tm // 8, 8, cout), axis=1) * 0.125
    yp_ref[...] = yp.astype(yp_ref.dtype)


def _bn_affine_kernel(yp_ref, scale_ref, shift_ref, o_ref):
    """BatchNorm affine on the already-pooled tensor (pool commutes with affine)."""
    o_ref[...] = (yp_ref[...] * scale_ref[...] + shift_ref[...]).astype(o_ref.dtype)


def _pick_tile(total, target, multiple):
    """Largest tile <= target that divides `total` and is a multiple of `multiple`;
    falls back to `total` (full extent) if none exists."""
    t = min(target, total)
    t -= t % multiple
    while t >= multiple:
        if total % t == 0:
            return t
        t -= multiple
    return total


def transition_block_forward(x, w, b, gamma, beta, *, tm=1024, tp=512):
    N, Cin, D, H, W = x.shape
    Cout = w.shape[0]
    assert D % 2 == 0 and H % 2 == 0 and W % 2 == 0

    Do, Ho, Wo = D // 2, H // 2, W // 2
    M = N * D * H * W          # total voxels (BN reduction size)
    P = M // 8                 # pooled voxels

    # ---- glue: window-grouped channels-last flatten (one HBM pass over x) ----
    # row order: (n, do, ho, wo, dd, hh, ww) -> 8 consecutive rows = one pool window
    xg = x.reshape(N, Cin, Do, 2, Ho, 2, Wo, 2)
    xg = jnp.transpose(xg, (0, 2, 4, 6, 3, 5, 7, 1))          # (N,Do,Ho,Wo,2,2,2,Cin)
    x2d = xg.reshape(M, Cin).astype(jnp.bfloat16)              # bf16 MXU input

    w2 = w.reshape(Cout, Cin).T.astype(jnp.bfloat16)           # (Cin, Cout) bf16
    b2 = b.reshape(1, Cout).astype(jnp.float32)

    # ---- 2-way M split -> leading "parallel" grid axis (uses both v7x TCs) ----
    num_splits = 2 if M % 16 == 0 else 1
    M_part = M // num_splits
    x3 = x2d.reshape(num_splits, M_part, Cin)

    # VMEM-aware tile cap (budget well under v7x's 64 MiB per-TC VMEM).
    per_row = Cin * 2 * 2 + Cout * 4 + (Cout * 4 * 2) // 8 + 1   # dbuf in + f32 tmp + dbuf out
    tm_cap = max(64, ((20 * 1024 * 1024) // per_row) // 64 * 64)
    tm_eff = _pick_tile(M_part, min(tm, tm_cap), 64)             # multiple of 64 -> tm//8 % 8 == 0

    # ---- kernel 1: conv1x1 + LeakyReLU + pooled output + BN statistics ----
    yp3, csum, csq = pl.pallas_call(
        _conv_relu_pool_stats_kernel,
        out_shape=(
            jax.ShapeDtypeStruct((num_splits, M_part // 8, Cout), jnp.float32),
            jax.ShapeDtypeStruct((num_splits, 1, Cout), jnp.float32),
            jax.ShapeDtypeStruct((num_splits, 1, Cout), jnp.float32),
        ),
        grid_spec=pltpu.PrefetchScalarGridSpec(
            num_scalar_prefetch=0,
            grid=(num_splits, M_part // tm_eff),
            in_specs=[
                pl.BlockSpec((None, tm_eff, Cin), lambda c, i: (c, i, 0)),
                pl.BlockSpec((Cin, Cout), lambda c, i: (0, 0)),
                pl.BlockSpec((1, Cout), lambda c, i: (0, 0)),
            ],
            out_specs=[
                pl.BlockSpec((None, tm_eff // 8, Cout), lambda c, i: (c, i, 0)),
                pl.BlockSpec((None, 1, Cout), lambda c, i: (c, 0, 0)),
                pl.BlockSpec((None, 1, Cout), lambda c, i: (c, 0, 0)),
            ],
        ),
        compiler_params=pltpu.CompilerParams(
            dimension_semantics=("parallel", "arbitrary"),
            vmem_limit_bytes=32 * 1024 * 1024,
        ),
    )(x3, w2, b2)

    # ---- glue: combine per-split partials -> training-mode BN affine params ----
    total_sum = jnp.sum(csum, axis=(0, 1))
    total_sq = jnp.sum(csq, axis=(0, 1))
    mean = total_sum / M
    var = jnp.maximum(total_sq / M - mean * mean, 0.0)   # clamp against cancellation
    inv = gamma.astype(jnp.float32) / jnp.sqrt(var + BN_EPS)
    scale = inv.reshape(1, Cout)
    shift = (beta.astype(jnp.float32) - mean * inv).reshape(1, Cout)
    # TODO(synk): running_mean/running_var updates (training bookkeeping) are not
    # part of the forward output and are not reproduced here.

    # ---- kernel 2: per-channel scale/shift on the pooled (8x smaller) tensor ----
    yp2d = yp3.reshape(P, Cout)
    tp_eff = _pick_tile(P, tp, 8)

    out2d = pl.pallas_call(
        _bn_affine_kernel,
        out_shape=jax.ShapeDtypeStruct((P, Cout), jnp.float32),
        grid_spec=pltpu.PrefetchScalarGridSpec(
            num_scalar_prefetch=0,
            grid=(P // tp_eff,),
            in_specs=[
                pl.BlockSpec((tp_eff, Cout), lambda i: (i, 0)),
                pl.BlockSpec((1, Cout), lambda i: (0, 0)),
                pl.BlockSpec((1, Cout), lambda i: (0, 0)),
            ],
            out_specs=pl.BlockSpec((tp_eff, Cout), lambda i: (i, 0)),
        ),
        compiler_params=pltpu.CompilerParams(
            dimension_semantics=("parallel",),
            vmem_limit_bytes=32 * 1024 * 1024,
        ),
    )(yp2d, scale, shift)

    # ---- glue: back to NCDHW ----
    out = out2d.reshape(N, Do, Ho, Wo, Cout).transpose(0, 4, 1, 2, 3)
    return out


def reference_forward(x, w, b, gamma, beta):
    """Pure-JAX reference mirroring the PyTorch forward (training-mode BN)."""
    N, Cin, D, H, W = x.shape
    Cout = w.shape[0]
    y = jnp.einsum("ncdhw,oc->nodhw", x, w.reshape(Cout, Cin)) + b.reshape(1, Cout, 1, 1, 1)
    y = jnp.where(y >= 0, y, NEG_SLOPE * y)
    mean = y.mean(axis=(0, 2, 3, 4), keepdims=True)
    var = ((y - mean) ** 2).mean(axis=(0, 2, 3, 4), keepdims=True)
    y = (y - mean) / jnp.sqrt(var + BN_EPS)
    y = y * gamma.reshape(1, Cout, 1, 1, 1) + beta.reshape(1, Cout, 1, 1, 1)
    y = y.reshape(N, Cout, D // 2, 2, H // 2, 2, W // 2, 2).mean(axis=(3, 5, 7))
    return y


if __name__ == "__main__":
    key = jax.random.PRNGKey(0)
    k1, k2, k3, k4, k5 = jax.random.split(key, 5)

    N, Cin, Cout, D, H, W = 2, 6, 4, 8, 8, 8
    x = jax.random.normal(k1, (N, Cin, D, H, W), jnp.float32)
    # Conv3d(kernel_size=1) params: weight (Cout, Cin, 1, 1, 1), bias (Cout,)
    w = 0.2 * jax.random.normal(k2, (Cout, Cin, 1, 1, 1), jnp.float32)
    b = 0.1 * jax.random.normal(k3, (Cout,), jnp.float32)
    # BatchNorm3d params (PyTorch init is gamma=1, beta=0; perturb to be non-trivial)
    gamma = 1.0 + 0.1 * jax.random.normal(k4, (Cout,), jnp.float32)
    beta = 0.1 * jax.random.normal(k5, (Cout,), jnp.float32)

    out = jax.block_until_ready(transition_block_forward(x, w, b, gamma, beta))
    assert out.shape == (N, Cout, D // 2, H // 2, W // 2)

    ref = reference_forward(x, w, b, gamma, beta)
    np.testing.assert_allclose(np.asarray(out), np.asarray(ref), rtol=2e-2, atol=2e-2)
    print("KERNEL_OK")
</pallas_src>

<mosaic_0001>
module attributes {stable_mosaic.version = 11 : i64} {
  func.func @_conv_relu_pool_stats_kernel(%arg0: i32, %arg1: i32, %arg2: memref<1x512x6xbf16, #tpu.memory_space<vmem>>, %arg3: memref<6x4xbf16, #tpu.memory_space<vmem>>, %arg4: memref<1x4xf32, #tpu.memory_space<vmem>>, %arg5: memref<1x64x4xf32, #tpu.memory_space<vmem>>, %arg6: memref<1x1x4xf32, #tpu.memory_space<vmem>>, %arg7: memref<1x1x4xf32, #tpu.memory_space<vmem>>) attributes {dimension_semantics = [#tpu.dimension_semantics<parallel>, #tpu.dimension_semantics<arbitrary>], iteration_bounds = array<i64: 2, 1>, scalar_prefetch = 0 : i64, scratch_operands = 0 : i64, tpu.core_type = #tpu.core_type<tc>, window_params = [{transform_indices = @transform_0, window_bounds = array<i64: 1, 512, 6>}, {pipeline_mode = #tpu.pipeline_mode<synchronous>, transform_indices = @transform_1, window_bounds = array<i64: 6, 4>}, {pipeline_mode = #tpu.pipeline_mode<synchronous>, transform_indices = @transform_2, window_bounds = array<i64: 1, 4>}, {transform_indices = @transform_3, window_bounds = array<i64: 1, 64, 4>}, {transform_indices = @transform_4, window_bounds = array<i64: 1, 1, 4>}, {transform_indices = @transform_5, window_bounds = array<i64: 1, 1, 4>}]} {
    %c0 = arith.constant 0 : index
    %c0_0 = arith.constant 0 : index
    %c0_1 = arith.constant 0 : index
    %0 = vector.load %arg2[%c0, %c0_0, %c0_1] : memref<1x512x6xbf16, #tpu.memory_space<vmem>>, vector<1x512x6xbf16>
    %1 = vector.shape_cast %0 : vector<1x512x6xbf16> to vector<512x6xbf16>
    %c0_2 = arith.constant 0 : index
    %c0_3 = arith.constant 0 : index
    %2 = vector.load %arg3[%c0_2, %c0_3] : memref<6x4xbf16, #tpu.memory_space<vmem>>, vector<6x4xbf16>
    %cst = arith.constant dense<0.000000e+00> : vector<512x4xf32>
    %3 = tpu.matmul %1, %2, %cst {dimension_numbers = #tpu.dot_dimension_numbers<[1], [0], [0], [1], [0, 0, 1, 1], [], []>} : vector<512x6xbf16>, vector<6x4xbf16>, vector<512x4xf32> -> vector<512x4xf32>
    %c0_4 = arith.constant 0 : index
    %c0_5 = arith.constant 0 : index
    %4 = vector.load %arg4[%c0_4, %c0_5] : memref<1x4xf32, #tpu.memory_space<vmem>>, vector<1x4xf32>
    %5 = vector.broadcast %4 : vector<1x4xf32> to vector<512x4xf32>
    %6 = arith.addf %3, %5 : vector<512x4xf32>
    %cst_6 = arith.constant 0.000000e+00 : f32
    %7 = vector.broadcast %cst_6 : f32 to vector<512x4xf32>
    %8 = arith.cmpf oge, %6, %7 : vector<512x4xf32>
    %cst_7 = arith.constant 0.00999999977 : f32
    %9 = vector.broadcast %cst_7 : f32 to vector<512x4xf32>
    %10 = arith.mulf %9, %6 : vector<512x4xf32>
    %11 = arith.select %8, %6, %10 : vector<512x4xi1>, vector<512x4xf32>
    %c0_i32 = arith.constant 0 : i32
    %12 = arith.cmpi eq, %arg1, %c0_i32 : i32
    %13 = arith.extui %12 : i1 to i32
    %c0_i32_8 = arith.constant 0 : i32
    %14 = arith.cmpi ne, %13, %c0_i32_8 : i32
    scf.if %14 {
      %cst_28 = arith.constant 0.000000e+00 : f32
      %39 = vector.broadcast %cst_28 : f32 to vector<1x4xf32>
      %c0_29 = arith.constant 0 : index
      %c0_30 = arith.constant 0 : index
      %c0_31 = arith.constant 0 : index
      %40 = vector.load %arg6[%c0_29, %c0_30, %c0_31] : memref<1x1x4xf32, #tpu.memory_space<vmem>>, vector<1x1x4xf32>
      %41 = vector.shape_cast %40 : vector<1x1x4xf32> to vector<1x4xf32>
      %42 = vector.shape_cast %39 : vector<1x4xf32> to vector<1x1x4xf32>
      tpu.vector_store %arg6[%c0_29, %c0_30, %c0_31], %42 {strides = array<i32>} : memref<1x1x4xf32, #tpu.memory_space<vmem>>, vector<1x1x4xf32>,
      %cst_32 = arith.constant 0.000000e+00 : f32
      %43 = vector.broadcast %cst_32 : f32 to vector<1x4xf32>
      %c0_33 = arith.constant 0 : index
      %c0_34 = arith.constant 0 : index
      %c0_35 = arith.constant 0 : index
      %44 = vector.load %arg7[%c0_33, %c0_34, %c0_35] : memref<1x1x4xf32, #tpu.memory_space<vmem>>, vector<1x1x4xf32>
      %45 = vector.shape_cast %44 : vector<1x1x4xf32> to vector<1x4xf32>
      %46 = vector.shape_cast %43 : vector<1x4xf32> to vector<1x1x4xf32>
      tpu.vector_store %arg7[%c0_33, %c0_34, %c0_35], %46 {strides = array<i32>} : memref<1x1x4xf32, #tpu.memory_space<vmem>>, vector<1x1x4xf32>,
    } else {
    }
    %c0_9 = arith.constant 0 : index
    %c0_10 = arith.constant 0 : index
    %c0_11 = arith.constant 0 : index
    %15 = vector.load %arg6[%c0_9, %c0_10, %c0_11] : memref<1x1x4xf32, #tpu.memory_space<vmem>>, vector<1x1x4xf32>
    %16 = vector.shape_cast %15 : vector<1x1x4xf32> to vector<1x4xf32>
    %cst_12 = arith.constant dense<0.000000e+00> : vector<4xf32>
    %17 = vector.multi_reduction <add>, %11, %cst_12 [0] : vector<512x4xf32> to vector<4xf32>
    %18 = vector.shape_cast %17 : vector<4xf32> to vector<1x4xf32>
    %19 = arith.addf %16, %18 : vector<1x4xf32>
    %c0_13 = arith.constant 0 : index
    %c0_14 = arith.constant 0 : index
    %c0_15 = arith.constant 0 : index
    %20 = vector.load %arg6[%c0_13, %c0_14, %c0_15] : memref<1x1x4xf32, #tpu.memory_space<vmem>>, vector<1x1x4xf32>
    %21 = vector.shape_cast %20 : vector<1x1x4xf32> to vector<1x4xf32>
    %22 = vector.shape_cast %19 : vector<1x4xf32> to vector<1x1x4xf32>
    tpu.vector_store %arg6[%c0_13, %c0_14, %c0_15], %22 {strides = array<i32>} : memref<1x1x4xf32, #tpu.memory_space<vmem>>, vector<1x1x4xf32>,
    %c0_16 = arith.constant 0 : index
    %c0_17 = arith.constant 0 : index
    %c0_18 = arith.constant 0 : index
    %23 = vector.load %arg7[%c0_16, %c0_17, %c0_18] : memref<1x1x4xf32, #tpu.memory_space<vmem>>, vector<1x1x4xf32>
    %24 = vector.shape_cast %23 : vector<1x1x4xf32> to vector<1x4xf32>
    %25 = arith.mulf %11, %11 : vector<512x4xf32>
    %cst_19 = arith.constant dense<0.000000e+00> : vector<4xf32>
    %26 = vector.multi_reduction <add>, %25, %cst_19 [0] : vector<512x4xf32> to vector<4xf32>
    %27 = vector.shape_cast %26 : vector<4xf32> to vector<1x4xf32>
    %28 = arith.addf %24, %27 : vector<1x4xf32>
    %c0_20 = arith.constant 0 : index
    %c0_21 = arith.constant 0 : index
    %c0_22 = arith.constant 0 : index
    %29 = vector.load %arg7[%c0_20, %c0_21, %c0_22] : memref<1x1x4xf32, #tpu.memory_space<vmem>>, vector<1x1x4xf32>
    %30 = vector.shape_cast %29 : vector<1x1x4xf32> to vector<1x4xf32>
    %31 = vector.shape_cast %28 : vector<1x4xf32> to vector<1x1x4xf32>
    tpu.vector_store %arg7[%c0_20, %c0_21, %c0_22], %31 {strides = array<i32>} : memref<1x1x4xf32, #tpu.memory_space<vmem>>, vector<1x1x4xf32>,
    %32 = vector.shape_cast %11 : vector<512x4xf32> to vector<64x8x4xf32>
    %cst_23 = arith.constant dense<0.000000e+00> : vector<64x4xf32>
    %33 = vector.multi_reduction <add>, %32, %cst_23 [1] : vector<64x8x4xf32> to vector<64x4xf32>
    %cst_24 = arith.constant 1.250000e-01 : f32
    %34 = vector.broadcast %cst_24 : f32 to vector<64x4xf32>
    %35 = arith.mulf %33, %34 : vector<64x4xf32>
    %c0_25 = arith.constant 0 : index
    %c0_26 = arith.constant 0 : index
    %c0_27 = arith.constant 0 : index
    %36 = vector.load %arg5[%c0_25, %c0_26, %c0_27] : memref<1x64x4xf32, #tpu.memory_space<vmem>>, vector<1x64x4xf32>
    %37 = vector.shape_cast %36 : vector<1x64x4xf32> to vector<64x4xf32>
    %38 = vector.shape_cast %35 : vector<64x4xf32> to vector<1x64x4xf32>
    tpu.vector_store %arg5[%c0_25, %c0_26, %c0_27], %38 {strides = array<i32>} : memref<1x64x4xf32, #tpu.memory_space<vmem>>, vector<1x64x4xf32>,
    return
  }
  func.func @transform_0(%arg0: i32, %arg1: i32) -> (i32, i32, i32) {
    %c0_i32 = arith.constant 0 : i32
    %c0_i32_0 = arith.constant 0 : i32
    return %arg0, %arg1, %c0_i32 : i32, i32, i32
  }
  func.func @transform_1(%arg0: i32, %arg1: i32) -> (i32, i32) {
    %c0_i32 = arith.constant 0 : i32
    %c0_i32_0 = arith.constant 0 : i32
    %c0_i32_1 = arith.constant 0 : i32
    return %c0_i32, %c0_i32_0 : i32, i32
  }
  func.func @transform_2(%arg0: i32, %arg1: i32) -> (i32, i32) {
    %c0_i32 = arith.constant 0 : i32
    %c0_i32_0 = arith.constant 0 : i32
    %c0_i32_1 = arith.constant 0 : i32
    return %c0_i32, %c0_i32_0 : i32, i32
  }
  func.func @transform_3(%arg0: i32, %arg1: i32) -> (i32, i32, i32) {
    %c0_i32 = arith.constant 0 : i32
    %c0_i32_0 = arith.constant 0 : i32
    return %arg0, %arg1, %c0_i32 : i32, i32, i32
  }
  func.func @transform_4(%arg0: i32, %arg1: i32) -> (i32, i32, i32) {
    %c0_i32 = arith.constant 0 : i32
    %c0_i32_0 = arith.constant 0 : i32
    %c0_i32_1 = arith.constant 0 : i32
    return %arg0, %c0_i32, %c0_i32_0 : i32, i32, i32
  }
  func.func @transform_5(%arg0: i32, %arg1: i32) -> (i32, i32, i32) {
    %c0_i32 = arith.constant 0 : i32
    %c0_i32_0 = arith.constant 0 : i32
    %c0_i32_1 = arith.constant 0 : i32
    return %arg0, %c0_i32, %c0_i32_0 : i32, i32, i32
  }
}

</mosaic_0001>

<llo_original>
// kernel: tpu_custom_call.1
$region0: #{tpu_custom_call.1}
  #allocation0 [shape = 'u32[]', space=smem, size = 0x4, offset = 0x4, fixed_abs, tag = 'smem constant byte address 0x4 - core index']
  #allocation1 [shape = 'u32[144,128]{1,0:T(1,128)}', space=vmem, size = 0x12000, scoped, tag = 'internal scratch']
  %s0 = inlined_call_operand.vmem [shape: bf16[2,512,6], index: 0, kind: input, shape index: {}]
  %s1 = inlined_call_operand.vmem [shape: bf16[6,4], index: 1, kind: input, shape index: {}]
  %s2 = inlined_call_operand.vmem [shape: f32[1,4], index: 2, kind: input, shape index: {}]
  %s3 = inlined_call_operand.vmem [shape: f32[2,64,4], index: 3, kind: output, shape index: {0}]
  %s4 = inlined_call_operand.hbm [shape: f32[2,1,4], index: 4, kind: output, shape index: {1}]
  %s5 = inlined_call_operand.hbm [shape: f32[2,1,4], index: 5, kind: output, shape index: {2}]
  %6 = xla_tuple %s3, %s4, %s5
  %s7 = sld [smem:[#allocation0]]
  $region65: #{tpu_custom_call.1} parent=0
    _
  %s9 = ssub.s32 1, %s7
  %s10 = scalar_select 0, %s9, %s7
  $region1: #{tpu_custom_call.1} parent=0
    #allocation2 [shape = 'u8[1024]{0}', space=vmem, size = 0x400, scoped, tag = 'output window, operand 1']
    #allocation3 [shape = 's32[2]{0}', space=sflag, size = 0x8, scoped, tag = 'scoped memory for tpu_custom_call.1']
    #allocation4 [shape = 'u8[1024]{0}', space=vmem, size = 0x400, scoped, tag = 'output window, operand 2']
    #allocation5 [shape = 's32[2]{0}', space=sflag, size = 0x8, scoped, tag = 'scoped memory for tpu_custom_call.1']
    %11 = vsyncpa [#allocation3], 0
    %s12 = scalar_lea.sflag [#allocation3], 1
    %13 = vsyncpa %s12, 0
    %14 = vsyncpa [#allocation5], 0
    %s15 = scalar_lea.sflag [#allocation5], 1
    %16 = vsyncpa %s15, 0
    loop: start=0, step=1, limit=4
    $region2: #{tpu_custom_call.1} parent=1 // loop_pre_header
      _
    $region3: #{tpu_custom_call.1} parent=1 // loop_header
      %s18 = sphi 0, %s22
      %p19 = scmp.ge.s32.totalorder %s18, 4
      %s25 = sphi 0, %s37
      %s26 = sphi 0, %s33
      %s27 = sphi 0, %s25
      %s28 = sphi 0, %s26
      %s29 = sphi 0, %s27
      %s30 = sphi 0, %s28
      %s42 = sphi 0, %s44
      %s45 = sphi 0, %s42
      %s46 = sphi 0, %s45
      %s62 = sphi 0, %s46
      %s66 = sphi 0, %s66
      %s68 = sphi 0, %s66
      %s69 = sphi 0, %s68
      %s83 = sphi 0, %s69
      %s87 = sphi 0, %s87
      %s89 = sphi 0, %s87
      %s90 = sphi 0, %s89
      %s104 = sphi 0, %s90
      %s112 = sphi 0, %s114
      %s115 = sphi 0, %s112
      %s116 = sphi 0, %s115
      %s132 = sphi 0, %s116
      %s138 = sphi 0, %s140
      %s141 = sphi 0, %s138
      %s142 = sphi 0, %s141
      %s158 = sphi 0, %s142
      %s164 = sphi 0, %s166
      %s167 = sphi 0, %s164
      %s168 = sphi 0, %s167
      %s184 = sphi 0, %s168
    $region4: #{tpu_custom_call.1} parent=1 // loop_header_branch
      %21 = sbr.rel (%p19) target = $region8
    $region5: #{tpu_custom_call.1} parent=1 // loop_body
      %s23 = ssub.s32 %s18, 1
      %s24 = ssub.s32 %s18, 2
      %s31 = sadd.s32 1, %s26
      %p32 = scmp.ge.s32.totalorder %s31, 1
      %s33 = scalar_select %p32, 0, %s31
      %s34 = sadd.s32 1, %s25
      %s35 = scalar_select %p32, %s34, %s25
      %p36 = scmp.ge.s32.totalorder %s35, 2
      %s37 = scalar_select %p36, 0, %s35
      %s38 = ssub.s32 %s25, %s37
      %s39 = ssub.s32 %s26, %s33
      %s40 = sor.u32 %s38, %s39
      %p41 = scmp.eq.s32.totalorder %s40, 0
      %s43 = sadd.s32 %s42, 1
      %s44 = scalar_select %p41, %s42, %s43
      %p47 = pneg %p41
      %p48 = scmp.eq.s32.totalorder %s18, 1
      %p49 = por %p47, %p48
      %p50 = scmp.ne.s32.totalorder %s42, %s45
      %p51 = scmp.eq.s32.totalorder %s18, 0
      %p52 = por %p50, %p51
      %p53 = scmp.ne.s32.totalorder %s42, %s45
      %p54 = scmp.eq.s32.totalorder %s23, 1
      %p55 = por %p53, %p54
      %p56 = scmp.ne.s32.totalorder %s45, %s46
      %p57 = scmp.eq.s32.totalorder %s23, 0
      %p58 = por %p56, %p57
      %p59 = scmp.ne.s32.totalorder %s45, %s46
      %p60 = scmp.eq.s32.totalorder %s24, 1
      %p61 = por %p59, %p60
      %p63 = scmp.ne.s32.totalorder %s46, %s62
      %p64 = scmp.eq.s32.totalorder %s24, 0
      %p65 = por %p63, %p64
      %s67 = sadd.s32 %s66, 1
      %p70 = scmp.eq.s32.totalorder %s18, 1
      %p71 = scmp.ne.s32.totalorder %s66, %s68
      %p72 = scmp.eq.s32.totalorder %s18, 0
      %p73 = por %p71, %p72
      %p74 = scmp.ne.s32.totalorder %s66, %s68
      %p75 = scmp.eq.s32.totalorder %s23, 1
      %p76 = por %p74, %p75
      %p77 = scmp.ne.s32.totalorder %s68, %s69
      %p78 = scmp.eq.s32.totalorder %s23, 0
      %p79 = por %p77, %p78
      %p80 = scmp.ne.s32.totalorder %s68, %s69
      %p81 = scmp.eq.s32.totalorder %s24, 1
      %p82 = por %p80, %p81
      %p84 = scmp.ne.s32.totalorder %s69, %s83
      %p85 = scmp.eq.s32.totalorder %s24, 0
      %p86 = por %p84, %p85
      %s88 = sadd.s32 %s87, 1
      %p91 = scmp.eq.s32.totalorder %s18, 1
      %p92 = scmp.ne.s32.totalorder %s87, %s89
      %p93 = scmp.eq.s32.totalorder %s18, 0
      %p94 = por %p92, %p93
      %p95 = scmp.ne.s32.totalorder %s87, %s89
      %p96 = scmp.eq.s32.totalorder %s23, 1
      %p97 = por %p95, %p96
      %p98 = scmp.ne.s32.totalorder %s89, %s90
      %p99 = scmp.eq.s32.totalorder %s23, 0
      %p100 = por %p98, %p99
      %p101 = scmp.ne.s32.totalorder %s89, %s90
      %p102 = scmp.eq.s32.totalorder %s24, 1
      %p103 = por %p101, %p102
      %p105 = scmp.ne.s32.totalorder %s90, %s104
      %p106 = scmp.eq.s32.totalorder %s24, 0
      %p107 = por %p105, %p106
      %s108 = ssub.s32 %s25, %s37
      %s109 = ssub.s32 %s26, %s33
      %s110 = sor.u32 %s108, %s109
      %p111 = scmp.eq.s32.totalorder %s110, 0
      %s113 = sadd.s32 %s112, 1
      %s114 = scalar_select %p111, %s112, %s113
      %p117 = pneg %p111
      %p118 = scmp.eq.s32.totalorder %s18, 1
      %p119 = por %p117, %p118
      %p120 = scmp.ne.s32.totalorder %s112, %s115
      %p121 = scmp.eq.s32.totalorder %s18, 0
      %p122 = por %p120, %p121
      %p123 = scmp.ne.s32.totalorder %s112, %s115
      %p124 = scmp.eq.s32.totalorder %s23, 1
      %p125 = por %p123, %p124
      %p126 = scmp.ne.s32.totalorder %s115, %s116
      %p127 = scmp.eq.s32.totalorder %s23, 0
      %p128 = por %p126, %p127
      %p129 = scmp.ne.s32.totalorder %s115, %s116
      %p130 = scmp.eq.s32.totalorder %s24, 1
      %p131 = por %p129, %p130
      %p133 = scmp.ne.s32.totalorder %s116, %s132
      %p134 = scmp.eq.s32.totalorder %s24, 0
      %p135 = por %p133, %p134
      %s136 = ssub.s32 %s25, %s37
      %p137 = scmp.eq.s32.totalorder %s136, 0
      %s139 = sadd.s32 %s138, 1
      %s140 = scalar_select %p137, %s138, %s139
      %p143 = pneg %p137
      %p144 = scmp.eq.s32.totalorder %s18, 1
      %p145 = por %p143, %p144
      %p146 = scmp.ne.s32.totalorder %s138, %s141
      %p147 = scmp.eq.s32.totalorder %s18, 0
      %p148 = por %p146, %p147
      %p149 = scmp.ne.s32.totalorder %s138, %s141
      %p150 = scmp.eq.s32.totalorder %s23, 1
      %p151 = por %p149, %p150
      %p152 = scmp.ne.s32.totalorder %s141, %s142
      %p153 = scmp.eq.s32.totalorder %s23, 0
      %p154 = por %p152, %p153
      %p155 = scmp.ne.s32.totalorder %s141, %s142
      %p156 = scmp.eq.s32.totalorder %s24, 1
      %p157 = por %p155, %p156
      %p159 = scmp.ne.s32.totalorder %s142, %s158
      %p160 = scmp.eq.s32.totalorder %s24, 0
      %p161 = por %p159, %p160
      %s162 = ssub.s32 %s25, %s37
      %p163 = scmp.eq.s32.totalorder %s162, 0
      %s165 = sadd.s32 %s164, 1
      %s166 = scalar_select %p163, %s164, %s165
      %p169 = pneg %p163
      %p170 = scmp.eq.s32.totalorder %s18, 1
      %p171 = por %p169, %p170
      %p172 = scmp.ne.s32.totalorder %s164, %s167
      %p173 = scmp.eq.s32.totalorder %s18, 0
      %p174 = por %p172, %p173
      %p175 = scmp.ne.s32.totalorder %s164, %s167
      %p176 = scmp.eq.s32.totalorder %s23, 1
      %p177 = por %p175, %p176
      %p178 = scmp.ne.s32.totalorder %s167, %s168
      %p179 = scmp.eq.s32.totalorder %s23, 0
      %p180 = por %p178, %p179
      %p181 = scmp.ne.s32.totalorder %s167, %s168
      %p182 = scmp.eq.s32.totalorder %s24, 1
      %p183 = por %p181, %p182
      %p185 = scmp.ne.s32.totalorder %s168, %s184
      %p186 = scmp.eq.s32.totalorder %s24, 0
      %p187 = por %p185, %p186
      %p188 = scmp.le.s32.totalorder 1, %s18
      %p189 = scmp.lt.s32.totalorder %s18, 3
      %p190 = pnand %p188, %p189
      %p191 = pneg %p190
      // Predicated region
      $region9: #{tpu_custom_call.1} parent=5 // pred_check
        _
      $region10: #{tpu_custom_call.1} parent=5 // pred_check_branch
        %193 = sbr.rel (%p190) target = $region12
      $region11: #{tpu_custom_call.1} parent=5 // pred_region
        %s194 = ssub.s32 %s18, 1
        // Predicated region
        $region13: #{tpu_custom_call.1} parent=11 // pred_check
          %p195 = pneg %p79
        $region14: #{tpu_custom_call.1} parent=11 // pred_check_branch
          %197 = sbr.rel (%p195) target = $region16
        $region15: #{tpu_custom_call.1} parent=11 // pred_region
          _
        $region16: #{tpu_custom_call.1} parent=11 // pred_fallthru
          _
        // Predicated region
        $region17: #{tpu_custom_call.1} parent=11 // pred_check
          %p198 = pneg %p100
        $region18: #{tpu_custom_call.1} parent=11 // pred_check_branch
          %200 = sbr.rel (%p198) target = $region20
        $region19: #{tpu_custom_call.1} parent=11 // pred_region
          _
        $region20: #{tpu_custom_call.1} parent=11 // pred_fallthru
          _
      $region12: #{tpu_custom_call.1} parent=5 // pred_fallthru
        _
      %p201 = scmp.lt.s32.totalorder %s18, 2
      // Predicated region
      $region21: #{tpu_custom_call.1} parent=5 // pred_check
        %p202 = pneg %p201
      $region22: #{tpu_custom_call.1} parent=5 // pred_check_branch
        %204 = sbr.rel (%p202) target = $region24
      $region23: #{tpu_custom_call.1} parent=5 // pred_region
        // Predicated region
        $region25: #{tpu_custom_call.1} parent=23 // pred_check
          %p205 = pneg %p52
        $region26: #{tpu_custom_call.1} parent=23 // pred_check_branch
          %207 = sbr.rel (%p205) target = $region28
        $region27: #{tpu_custom_call.1} parent=23 // pred_region
          %s208 = smul.u32 64, %s26
          %p209 = scmp.lt.s32.totalorder %s25, 1
          %s210 = scalar_select %p209, %s25, 1
          %p211 = scmp.lt.s32.totalorder %s208, 63
          %s212 = scalar_select %p211, %s208, 63
          %s213 = smul.addr %s210, 64
          %s214 = sadd.s32 %s212, %s213
          %s215 = smul.addr %s214, 4
          %s216 = scalar_lea.vmem %s0, %s215
          %s217 = smul.u32 64, %s26
        $region28: #{tpu_custom_call.1} parent=23 // pred_fallthru
          _
      $region24: #{tpu_custom_call.1} parent=5 // pred_fallthru
        _
      %p218 = scmp.le.s32.totalorder 1, %s18
      %p219 = scmp.lt.s32.totalorder %s18, 3
      %p220 = pnand %p218, %p219
      %p221 = pneg %p220
      // Predicated region
      $region29: #{tpu_custom_call.1} parent=5 // pred_check
        _
      $region30: #{tpu_custom_call.1} parent=5 // pred_check_branch
        %223 = sbr.rel (%p220) target = $region32
      $region31: #{tpu_custom_call.1} parent=5 // pred_region
        %s224 = ssub.s32 %s18, 1
        %s225 = smul.u32 64, %s28
        %p226 = scmp.lt.s32.totalorder %s27, 1
        %s227 = scalar_select %p226, %s27, 1
        %p228 = scmp.lt.s32.totalorder %s225, 63
        %s229 = scalar_select %p228, %s225, 63
        %s230 = smul.addr %s227, 64
        %s231 = sadd.s32 %s229, %s230
        %s232 = smul.addr %s231, 4
        %s233 = scalar_lea.vmem %s0, %s232
        %p234 = pneg %p58
        %p235 = pneg %p55
        %p236 = pneg %p79
        %p237 = pneg %p76
        %p238 = pneg %p100
        %p239 = pneg %p97
        %p240 = pneg %p128
        %p241 = pneg %p125
        %s242 = smul.u32 8, %s28
        %p243 = scmp.lt.s32.totalorder %s27, 1
        %s244 = scalar_select %p243, %s27, 1
        %p245 = scmp.lt.s32.totalorder %s242, 7
        %s246 = scalar_select %p245, %s242, 7
        %s247 = smul.addr %s244, 8
        %s248 = sadd.s32 %s246, %s247
        %s249 = smul.addr %s248, 8
        %s250 = scalar_lea.vmem %s3, %s249
        %p251 = pneg %p154
        %p252 = pneg %p151
        %s253 = sand.u32 %s141, 1
        %s254 = scalar_lea.sflag [#allocation3], %s253
        %s255 = sand.u32 %s141, 1
        %s256 = scalar_lea.vmem [#allocation2], %s255
        %p257 = pneg %p180
        %p258 = pneg %p177
        %s259 = sand.u32 %s167, 1
        %s260 = scalar_lea.sflag [#allocation5], %s259
        %s261 = sand.u32 %s167, 1
        %s262 = scalar_lea.vmem [#allocation4], %s261
        %s263 = smul.u32 64, %s28
        %p264 = scmp.lt.s32.totalorder %s27, 1
        %s265 = scalar_select %p264, %s27, 1
        %p266 = scmp.lt.s32.totalorder %s263, 63
        %s267 = scalar_select %p266, %s263, 63
        %s268 = smul.addr %s265, 64
        %s269 = sadd.s32 %s267, %s268
        %s270 = smul.addr %s269, 4
        %s271 = scalar_lea.vmem %s0, %s270
        %s272 = smul.u32 64, %s28
        %s273 = smul.u32 8, %s28
        %p274 = scmp.lt.s32.totalorder %s27, 1
        %s275 = scalar_select %p274, %s27, 1
        %p276 = scmp.lt.s32.totalorder %s273, 7
        %s277 = scalar_select %p276, %s273, 7
        %s278 = smul.addr %s275, 8
        %s279 = sadd.s32 %s277, %s278
        %s280 = smul.addr %s279, 8
        %s281 = scalar_lea.vmem %s3, %s280
        %s282 = smul.u32 8, %s28
        %v284 = vld [vmem:[%s271] sm:$0xf]
        %v285 = vld [vmem:[%s271 + $0x4] sm:$0xf]
        %v286 = vld [vmem:[%s271 + $0x8] sm:$0xf]
        %v287 = vld [vmem:[%s271 + $0xc] sm:$0xf]
        %v288 = vld [vmem:[%s271 + $0x10] sm:$0xf]
        %v289 = vld [vmem:[%s271 + $0x14] sm:$0xf]
        %v290 = vld [vmem:[%s271 + $0x18] sm:$0xf]
        %v291 = vld [vmem:[%s271 + $0x1c] sm:$0xf]
        %v292 = vld [vmem:[%s271 + $0x20] sm:$0xf]
        %v293 = vld [vmem:[%s271 + $0x24] sm:$0xf]
        %v294 = vld [vmem:[%s271 + $0x28] sm:$0xf]
        %v295 = vld [vmem:[%s271 + $0x2c] sm:$0xf]
        %v296 = vld [vmem:[%s271 + $0x30] sm:$0xf]
        %v297 = vld [vmem:[%s271 + $0x34] sm:$0xf]
        %v298 = vld [vmem:[%s271 + $0x38] sm:$0xf]
        %v299 = vld [vmem:[%s271 + $0x3c] sm:$0xf]
        %v300 = vld [vmem:[%s271 + $0x40] sm:$0xf]
        %v301 = vld [vmem:[%s271 + $0x44] sm:$0xf]
        %v302 = vld [vmem:[%s271 + $0x48] sm:$0xf]
        %v303 = vld [vmem:[%s271 + $0x4c] sm:$0xf]
        %v304 = vld [vmem:[%s271 + $0x50] sm:$0xf]
        %v305 = vld [vmem:[%s271 + $0x54] sm:$0xf]
        %v306 = vld [vmem:[%s271 + $0x58] sm:$0xf]
        %v307 = vld [vmem:[%s271 + $0x5c] sm:$0xf]
        %v308 = vld [vmem:[%s271 + $0x60] sm:$0xf]
        %v309 = vld [vmem:[%s271 + $0x64] sm:$0xf]
        %v310 = vld [vmem:[%s271 + $0x68] sm:$0xf]
        %v311 = vld [vmem:[%s271 + $0x6c] sm:$0xf]
        %v312 = vld [vmem:[%s271 + $0x70] sm:$0xf]
        %v313 = vld [vmem:[%s271 + $0x74] sm:$0xf]
        %v314 = vld [vmem:[%s271 + $0x78] sm:$0xf]
        %v315 = vld [vmem:[%s271 + $0x7c] sm:$0xf]
        %v316 = vld [vmem:[%s271 + $0x80] sm:$0xf]
        %v317 = vld [vmem:[%s271 + $0x84] sm:$0xf]
        %v318 = vld [vmem:[%s271 + $0x88] sm:$0xf]
        %v319 = vld [vmem:[%s271 + $0x8c] sm:$0xf]
        %v320 = vld [vmem:[%s271 + $0x90] sm:$0xf]
        %v321 = vld [vmem:[%s271 + $0x94] sm:$0xf]
        %v322 = vld [vmem:[%s271 + $0x98] sm:$0xf]
        %v323 = vld [vmem:[%s271 + $0x9c] sm:$0xf]
        %v324 = vld [vmem:[%s271 + $0xa0] sm:$0xf]
        %v325 = vld [vmem:[%s271 + $0xa4] sm:$0xf]
        %v326 = vld [vmem:[%s271 + $0xa8] sm:$0xf]
        %v327 = vld [vmem:[%s271 + $0xac] sm:$0xf]
        %v328 = vld [vmem:[%s271 + $0xb0] sm:$0xf]
        %v329 = vld [vmem:[%s271 + $0xb4] sm:$0xf]
        %v330 = vld [vmem:[%s271 + $0xb8] sm:$0xf]
        %v331 = vld [vmem:[%s271 + $0xbc] sm:$0xf]
        %v332 = vld [vmem:[%s271 + $0xc0] sm:$0xf]
        %v333 = vld [vmem:[%s271 + $0xc4] sm:$0xf]
        %v334 = vld [vmem:[%s271 + $0xc8] sm:$0xf]
        %v335 = vld [vmem:[%s271 + $0xcc] sm:$0xf]
        %v336 = vld [vmem:[%s271 + $0xd0] sm:$0xf]
        %v337 = vld [vmem:[%s271 + $0xd4] sm:$0xf]
        %v338 = vld [vmem:[%s271 + $0xd8] sm:$0xf]
        %v339 = vld [vmem:[%s271 + $0xdc] sm:$0xf]
        %v340 = vld [vmem:[%s271 + $0xe0] sm:$0xf]
        %v341 = vld [vmem:[%s271 + $0xe4] sm:$0xf]
        %v342 = vld [vmem:[%s271 + $0xe8] sm:$0xf]
        %v343 = vld [vmem:[%s271 + $0xec] sm:$0xf]
        %v344 = vld [vmem:[%s271 + $0xf0] sm:$0xf]
        %v345 = vld [vmem:[%s271 + $0xf4] sm:$0xf]
        %v346 = vld [vmem:[%s271 + $0xf8] sm:$0xf]
        %v347 = vld [vmem:[%s271 + $0xfc] sm:$0xf]
        %v348 = vld [vmem:[%s1] sm:$0x7]
        %v349 = vld [vmem:[%s2] sm:$0x1]
        %v351 = vlaneseq
        %v352 = vshrl.u32 %v351, 7
        %v353 = vsub.s32 0, %v352
        %v354 = vrot.slane %v349, %v353
        %v420 = vunpack.c.l.b16 %v284
        %v421 = vunpack.c.l.b16 %v285
        %v422 = vunpack.c.l.b16 %v286
        %v423 = vunpack.c.l.b16 %v287
        %v424 = vunpack.c.l.b16 %v288
        %v425 = vunpack.c.l.b16 %v289
        %v426 = vunpack.c.l.b16 %v290
        %v427 = vunpack.c.l.b16 %v291
        %v428 = vunpack.c.l.b16 %v292
        %v429 = vunpack.c.l.b16 %v293
        %v430 = vunpack.c.l.b16 %v294
        %v431 = vunpack.c.l.b16 %v295
        %v432 = vunpack.c.l.b16 %v296
        %v433 = vunpack.c.l.b16 %v297
        %v434 = vunpack.c.l.b16 %v298
        %v435 = vunpack.c.l.b16 %v299
        %v436 = vunpack.c.l.b16 %v300
        %v437 = vunpack.c.l.b16 %v301
        %v438 = vunpack.c.l.b16 %v302
        %v439 = vunpack.c.l.b16 %v303
        %v440 = vunpack.c.l.b16 %v304
        %v441 = vunpack.c.l.b16 %v305
        %v442 = vunpack.c.l.b16 %v306
        %v443 = vunpack.c.l.b16 %v307
        %v444 = vunpack.c.l.b16 %v308
        %v445 = vunpack.c.l.b16 %v309
        %v446 = vunpack.c.l.b16 %v310
        %v447 = vunpack.c.l.b16 %v311
        %v448 = vunpack.c.l.b16 %v312
        %v449 = vunpack.c.l.b16 %v313
        %v450 = vunpack.c.l.b16 %v314
        %v451 = vunpack.c.l.b16 %v315
        %v452 = vunpack.c.l.b16 %v316
        %v453 = vunpack.c.l.b16 %v317
        %v454 = vunpack.c.l.b16 %v318
        %v455 = vunpack.c.l.b16 %v319
        %v456 = vunpack.c.l.b16 %v320
        %v457 = vunpack.c.l.b16 %v321
        %v458 = vunpack.c.l.b16 %v322
        %v459 = vunpack.c.l.b16 %v323
        %v460 = vunpack.c.l.b16 %v324
        %v461 = vunpack.c.l.b16 %v325
        %v462 = vunpack.c.l.b16 %v326
        %v463 = vunpack.c.l.b16 %v327
        %v464 = vunpack.c.l.b16 %v328
        %v465 = vunpack.c.l.b16 %v329
        %v466 = vunpack.c.l.b16 %v330
        %v467 = vunpack.c.l.b16 %v331
        %v468 = vunpack.c.l.b16 %v332
        %v469 = vunpack.c.l.b16 %v333
        %v470 = vunpack.c.l.b16 %v334
        %v471 = vunpack.c.l.b16 %v335
        %v472 = vunpack.c.l.b16 %v336
        %v473 = vunpack.c.l.b16 %v337
        %v474 = vunpack.c.l.b16 %v338
        %v475 = vunpack.c.l.b16 %v339
        %v476 = vunpack.c.l.b16 %v340
        %v477 = vunpack.c.l.b16 %v341
        %v478 = vunpack.c.l.b16 %v342
        %v479 = vunpack.c.l.b16 %v343
        %v480 = vunpack.c.l.b16 %v344
        %v481 = vunpack.c.l.b16 %v345
        %v482 = vunpack.c.l.b16 %v346
        %v483 = vunpack.c.l.b16 %v347
        %v484 = vpack.c.b16 %v421, %v420
        %v485 = vpack.c.b16 %v423, %v422
        %v486 = vpack.c.b16 %v425, %v424
        %v487 = vpack.c.b16 %v427, %v426
        %v488 = vpack.c.b16 %v429, %v428
        %v489 = vpack.c.b16 %v431, %v430
        %v490 = vpack.c.b16 %v433, %v432
        %v491 = vpack.c.b16 %v435, %v434
        %v492 = vpack.c.b16 %v437, %v436
        %v493 = vpack.c.b16 %v439, %v438
        %v494 = vpack.c.b16 %v441, %v440
        %v495 = vpack.c.b16 %v443, %v442
        %v496 = vpack.c.b16 %v445, %v444
        %v497 = vpack.c.b16 %v447, %v446
        %v498 = vpack.c.b16 %v449, %v448
        %v499 = vpack.c.b16 %v451, %v450
        %v500 = vpack.c.b16 %v453, %v452
        %v501 = vpack.c.b16 %v455, %v454
        %v502 = vpack.c.b16 %v457, %v456
        %v503 = vpack.c.b16 %v459, %v458
        %v504 = vpack.c.b16 %v461, %v460
        %v505 = vpack.c.b16 %v463, %v462
        %v506 = vpack.c.b16 %v465, %v464
        %v507 = vpack.c.b16 %v467, %v466
        %v508 = vpack.c.b16 %v469, %v468
        %v509 = vpack.c.b16 %v471, %v470
        %v510 = vpack.c.b16 %v473, %v472
        %v511 = vpack.c.b16 %v475, %v474
        %v512 = vpack.c.b16 %v477, %v476
        %v513 = vpack.c.b16 %v479, %v478
        %v514 = vpack.c.b16 %v481, %v480
        %v515 = vpack.c.b16 %v483, %v482
        %vm516 = vcmask 48128
        %v518 = vsel %vm516, %v484, 0
        %v521 = vsel %vm516, %v485, 0
        %v524 = vsel %vm516, %v486, 0
        %v527 = vsel %vm516, %v487, 0
        %v530 = vsel %vm516, %v488, 0
        %v533 = vsel %vm516, %v489, 0
        %v536 = vsel %vm516, %v490, 0
        %v539 = vsel %vm516, %v491, 0
        %v542 = vsel %vm516, %v492, 0
        %v545 = vsel %vm516, %v493, 0
        %v548 = vsel %vm516, %v494, 0
        %v551 = vsel %vm516, %v495, 0
        %v554 = vsel %vm516, %v496, 0
        %v557 = vsel %vm516, %v497, 0
        %v560 = vsel %vm516, %v498, 0
        %v563 = vsel %vm516, %v499, 0
        %v566 = vsel %vm516, %v500, 0
        %v569 = vsel %vm516, %v501, 0
        %v572 = vsel %vm516, %v502, 0
        %v575 = vsel %vm516, %v503, 0
        %v578 = vsel %vm516, %v504, 0
        %v581 = vsel %vm516, %v505, 0
        %v584 = vsel %vm516, %v506, 0
        %v587 = vsel %vm516, %v507, 0
        %v590 = vsel %vm516, %v508, 0
        %v593 = vsel %vm516, %v509, 0
        %v596 = vsel %vm516, %v510, 0
        %v599 = vsel %vm516, %v511, 0
        %v602 = vsel %vm516, %v512, 0
        %v605 = vsel %vm516, %v513, 0
        %v608 = vsel %vm516, %v514, 0
        %v611 = vsel %vm516, %v515, 0
        %vm613 = vcmask 1042432
        %v615 = vsel %vm613, %v348, 0
        %617 = vmatprep.subr.bf16.mxu0 0
        %618 = vmatpush1.bf16.msra.mxu0 %v615
        %619 = vmatprep.subr.bf16.mxu0 0
        %620 = vmatpush1.bf16.msra.mxu0 0
        %621 = vmatprep.subr.bf16.mxu0 0
        %622 = vmatpush1.bf16.msra.mxu0 0
        %623 = vmatprep.subr.bf16.mxu0 0
        %624 = vmatpush1.bf16.msra.mxu0 0
        %625 = vmatprep.subr.bf16.mxu0 0
        %626 = vmatpush1.bf16.msra.mxu0 0
        %627 = vmatprep.subr.bf16.mxu0 0
        %628 = vmatpush1.bf16.msra.mxu0 0
        %629 = vmatprep.subr.bf16.mxu0 0
        %630 = vmatpush1.bf16.msra.mxu0 0
        %631 = vmatprep.subr.bf16.mxu0 0
        %632 = vmatpush1.bf16.msra.mxu0 0
        %633 = vmatprep.subr.bf16.mxu0 0
        %634 = vmatpush1.bf16.msra.mxu0 0
        %635 = vmatprep.subr.bf16.mxu0 0
        %636 = vmatpush1.bf16.msra.mxu0 0
        %637 = vmatprep.subr.bf16.mxu0 0
        %638 = vmatpush1.bf16.msra.mxu0 0
        %639 = vmatprep.subr.bf16.mxu0 0
        %640 = vmatpush1.bf16.msra.mxu0 0
        %641 = vmatprep.subr.bf16.mxu0 0
        %642 = vmatpush1.bf16.msra.mxu0 0
        %643 = vmatprep.subr.bf16.mxu0 0
        %644 = vmatpush1.bf16.msra.mxu0 0
        %645 = vmatprep.subr.bf16.mxu0 0
        %646 = vmatpush1.bf16.msra.mxu0 0
        %647 = vmatprep.subr.bf16.mxu0 0
        %648 = vmatpush1.bf16.msra.mxu0 0
        %649 = vmatprep.mubr.bf16.mxu0 0
        %650 = vmatmul.mubr.bf16.gmra.mrb[0].mxu0 %v518
        %v651 = vpop.f32.mrb[0].mxu0
        %v652 = vadd.f32 %v354, %v651
        %v653 = vpop.f32.mrb[0].mxu0
        %v654 = vpop.f32.mrb[0].mxu0
        %v655 = vadd.f32 %v354, %v654
        %v656 = vpop.f32.mrb[0].mxu0
        %657 = vmatprep.mubr.bf16.mxu0 0
        %658 = vmatmul.mubr.bf16.gmra.mrb[0].mxu0 %v521
        %v659 = vpop.f32.mrb[0].mxu0
        %v660 = vadd.f32 %v354, %v659
        %v661 = vpop.f32.mrb[0].mxu0
        %v662 = vpop.f32.mrb[0].mxu0
        %v663 = vadd.f32 %v354, %v662
        %v664 = vpop.f32.mrb[0].mxu0
        %665 = vmatprep.mubr.bf16.mxu0 0
        %666 = vmatmul.mubr.bf16.gmra.mrb[0].mxu0 %v524
        %v667 = vpop.f32.mrb[0].mxu0
        %v668 = vadd.f32 %v354, %v667
        %v669 = vpop.f32.mrb[0].mxu0
        %v670 = vpop.f32.mrb[0].mxu0
        %v671 = vadd.f32 %v354, %v670
        %v672 = vpop.f32.mrb[0].mxu0
        %673 = vmatprep.mubr.bf16.mxu0 0
        %674 = vmatmul.mubr.bf16.gmra.mrb[0].mxu0 %v527
        %v675 = vpop.f32.mrb[0].mxu0
        %v676 = vadd.f32 %v354, %v675
        %v677 = vpop.f32.mrb[0].mxu0
        %v678 = vpop.f32.mrb[0].mxu0
        %v679 = vadd.f32 %v354, %v678
        %v680 = vpop.f32.mrb[0].mxu0
        %681 = vmatprep.mubr.bf16.mxu0 0
        %682 = vmatmul.mubr.bf16.gmra.mrb[0].mxu0 %v530
        %v683 = vpop.f32.mrb[0].mxu0
        %v684 = vadd.f32 %v354, %v683
        %v685 = vpop.f32.mrb[0].mxu0
        %v686 = vpop.f32.mrb[0].mxu0
        %v687 = vadd.f32 %v354, %v686
        %v688 = vpop.f32.mrb[0].mxu0
        %689 = vmatprep.mubr.bf16.mxu0 0
        %690 = vmatmul.mubr.bf16.gmra.mrb[0].mxu0 %v533
        %v691 = vpop.f32.mrb[0].mxu0
        %v692 = vadd.f32 %v354, %v691
        %v693 = vpop.f32.mrb[0].mxu0
        %v694 = vpop.f32.mrb[0].mxu0
        %v695 = vadd.f32 %v354, %v694
        %v696 = vpop.f32.mrb[0].mxu0
        %697 = vmatprep.mubr.bf16.mxu0 0
        %698 = vmatmul.mubr.bf16.gmra.mrb[0].mxu0 %v536
        %v699 = vpop.f32.mrb[0].mxu0
        %v700 = vadd.f32 %v354, %v699
        %v701 = vpop.f32.mrb[0].mxu0
        %v702 = vpop.f32.mrb[0].mxu0
        %v703 = vadd.f32 %v354, %v702
        %v704 = vpop.f32.mrb[0].mxu0
        %705 = vmatprep.mubr.bf16.mxu0 0
        %706 = vmatmul.mubr.bf16.gmra.mrb[0].mxu0 %v539
        %v707 = vpop.f32.mrb[0].mxu0
        %v708 = vadd.f32 %v354, %v707
        %v709 = vpop.f32.mrb[0].mxu0
        %v710 = vpop.f32.mrb[0].mxu0
        %v711 = vadd.f32 %v354, %v710
        %v712 = vpop.f32.mrb[0].mxu0
        %713 = vmatprep.mubr.bf16.mxu0 0
        %714 = vmatmul.mubr.bf16.gmra.mrb[0].mxu0 %v542
        %v715 = vpop.f32.mrb[0].mxu0
        %v716 = vadd.f32 %v354, %v715
        %v717 = vpop.f32.mrb[0].mxu0
        %v718 = vpop.f32.mrb[0].mxu0
        %v719 = vadd.f32 %v354, %v718
        %v720 = vpop.f32.mrb[0].mxu0
        %721 = vmatprep.mubr.bf16.mxu0 0
        %722 = vmatmul.mubr.bf16.gmra.mrb[0].mxu0 %v545
        %v723 = vpop.f32.mrb[0].mxu0
        %v724 = vadd.f32 %v354, %v723
        %v725 = vpop.f32.mrb[0].mxu0
        %v726 = vpop.f32.mrb[0].mxu0
        %v727 = vadd.f32 %v354, %v726
        %v728 = vpop.f32.mrb[0].mxu0
        %729 = vmatprep.mubr.bf16.mxu0 0
        %730 = vmatmul.mubr.bf16.gmra.mrb[0].mxu0 %v548
        %v731 = vpop.f32.mrb[0].mxu0
        %v732 = vadd.f32 %v354, %v731
        %v733 = vpop.f32.mrb[0].mxu0
        %v734 = vpop.f32.mrb[0].mxu0
        %v735 = vadd.f32 %v354, %v734
        %v736 = vpop.f32.mrb[0].mxu0
        %737 = vmatprep.mubr.bf16.mxu0 0
        %738 = vmatmul.mubr.bf16.gmra.mrb[0].mxu0 %v551
        %v739 = vpop.f32.mrb[0].mxu0
        %v740 = vadd.f32 %v354, %v739
        %v741 = vpop.f32.mrb[0].mxu0
        %v742 = vpop.f32.mrb[0].mxu0
        %v743 = vadd.f32 %v354, %v742
        %v744 = vpop.f32.mrb[0].mxu0
        %745 = vmatprep.mubr.bf16.mxu0 0
        %746 = vmatmul.mubr.bf16.gmra.mrb[0].mxu0 %v554
        %v747 = vpop.f32.mrb[0].mxu0
        %v748 = vadd.f32 %v354, %v747
        %v749 = vpop.f32.mrb[0].mxu0
        %v750 = vpop.f32.mrb[0].mxu0
        %v751 = vadd.f32 %v354, %v750
        %v752 = vpop.f32.mrb[0].mxu0
        %753 = vmatprep.mubr.bf16.mxu0 0
        %754 = vmatmul.mubr.bf16.gmra.mrb[0].mxu0 %v557
        %v755 = vpop.f32.mrb[0].mxu0
        %v756 = vadd.f32 %v354, %v755
        %v757 = vpop.f32.mrb[0].mxu0
        %v758 = vpop.f32.mrb[0].mxu0
        %v759 = vadd.f32 %v354, %v758
        %v760 = vpop.f32.mrb[0].mxu0
        %761 = vmatprep.mubr.bf16.mxu0 0
        %762 = vmatmul.mubr.bf16.gmra.mrb[0].mxu0 %v560
        %v763 = vpop.f32.mrb[0].mxu0
        %v764 = vadd.f32 %v354, %v763
        %v765 = vpop.f32.mrb[0].mxu0
        %v766 = vpop.f32.mrb[0].mxu0
        %v767 = vadd.f32 %v354, %v766
        %v768 = vpop.f32.mrb[0].mxu0
        %769 = vmatprep.mubr.bf16.mxu0 0
        %770 = vmatmul.mubr.bf16.gmra.mrb[0].mxu0 %v563
        %v771 = vpop.f32.mrb[0].mxu0
        %v772 = vadd.f32 %v354, %v771
        %v773 = vpop.f32.mrb[0].mxu0
        %v774 = vpop.f32.mrb[0].mxu0
        %v775 = vadd.f32 %v354, %v774
        %v776 = vpop.f32.mrb[0].mxu0
        %777 = vmatprep.mubr.bf16.mxu0 0
        %778 = vmatmul.mubr.bf16.gmra.mrb[0].mxu0 %v566
        %v779 = vpop.f32.mrb[0].mxu0
        %v780 = vadd.f32 %v354, %v779
        %v781 = vpop.f32.mrb[0].mxu0
        %v782 = vpop.f32.mrb[0].mxu0
        %v783 = vadd.f32 %v354, %v782
        %v784 = vpop.f32.mrb[0].mxu0
        %785 = vmatprep.mubr.bf16.mxu0 0
        %786 = vmatmul.mubr.bf16.gmra.mrb[0].mxu0 %v569
        %v787 = vpop.f32.mrb[0].mxu0
        %v788 = vadd.f32 %v354, %v787
        %v789 = vpop.f32.mrb[0].mxu0
        %v790 = vpop.f32.mrb[0].mxu0
        %v791 = vadd.f32 %v354, %v790
        %v792 = vpop.f32.mrb[0].mxu0
        %793 = vmatprep.mubr.bf16.mxu0 0
        %794 = vmatmul.mubr.bf16.gmra.mrb[0].mxu0 %v572
        %v795 = vpop.f32.mrb[0].mxu0
        %v796 = vadd.f32 %v354, %v795
        %v797 = vpop.f32.mrb[0].mxu0
        %v798 = vpop.f32.mrb[0].mxu0
        %v799 = vadd.f32 %v354, %v798
        %v800 = vpop.f32.mrb[0].mxu0
        %801 = vmatprep.mubr.bf16.mxu0 0
        %802 = vmatmul.mubr.bf16.gmra.mrb[0].mxu0 %v575
        %v803 = vpop.f32.mrb[0].mxu0
        %v804 = vadd.f32 %v354, %v803
        %v805 = vpop.f32.mrb[0].mxu0
        %v806 = vpop.f32.mrb[0].mxu0
        %v807 = vadd.f32 %v354, %v806
        %v808 = vpop.f32.mrb[0].mxu0
        %809 = vmatprep.mubr.bf16.mxu0 0
        %810 = vmatmul.mubr.bf16.gmra.mrb[0].mxu0 %v578
        %v811 = vpop.f32.mrb[0].mxu0
        %v812 = vadd.f32 %v354, %v811
        %v813 = vpop.f32.mrb[0].mxu0
        %v814 = vpop.f32.mrb[0].mxu0
        %v815 = vadd.f32 %v354, %v814
        %v816 = vpop.f32.mrb[0].mxu0
        %817 = vmatprep.mubr.bf16.mxu0 0
        %818 = vmatmul.mubr.bf16.gmra.mrb[0].mxu0 %v581
        %v819 = vpop.f32.mrb[0].mxu0
        %v820 = vadd.f32 %v354, %v819
        %v821 = vpop.f32.mrb[0].mxu0
        %v822 = vpop.f32.mrb[0].mxu0
        %v823 = vadd.f32 %v354, %v822
        %v824 = vpop.f32.mrb[0].mxu0
        %825 = vmatprep.mubr.bf16.mxu0 0
        %826 = vmatmul.mubr.bf16.gmra.mrb[0].mxu0 %v584
        %v827 = vpop.f32.mrb[0].mxu0
        %v828 = vadd.f32 %v354, %v827
        %v829 = vpop.f32.mrb[0].mxu0
        %v830 = vpop.f32.mrb[0].mxu0
        %v831 = vadd.f32 %v354, %v830
        %v832 = vpop.f32.mrb[0].mxu0
        %833 = vmatprep.mubr.bf16.mxu0 0
        %834 = vmatmul.mubr.bf16.gmra.mrb[0].mxu0 %v587
        %v835 = vpop.f32.mrb[0].mxu0
        %v836 = vadd.f32 %v354, %v835
        %v837 = vpop.f32.mrb[0].mxu0
        %v838 = vpop.f32.mrb[0].mxu0
        %v839 = vadd.f32 %v354, %v838
        %v840 = vpop.f32.mrb[0].mxu0
        %841 = vmatprep.mubr.bf16.mxu0 0
        %842 = vmatmul.mubr.bf16.gmra.mrb[0].mxu0 %v590
        %v843 = vpop.f32.mrb[0].mxu0
        %v844 = vadd.f32 %v354, %v843
        %v845 = vpop.f32.mrb[0].mxu0
        %v846 = vpop.f32.mrb[0].mxu0
        %v847 = vadd.f32 %v354, %v846
        %v848 = vpop.f32.mrb[0].mxu0
        %849 = vmatprep.mubr.bf16.mxu0 0
        %850 = vmatmul.mubr.bf16.gmra.mrb[0].mxu0 %v593
        %v851 = vpop.f32.mrb[0].mxu0
        %v852 = vadd.f32 %v354, %v851
        %v853 = vpop.f32.mrb[0].mxu0
        %v854 = vpop.f32.mrb[0].mxu0
        %v855 = vadd.f32 %v354, %v854
        %v856 = vpop.f32.mrb[0].mxu0
        %857 = vmatprep.mubr.bf16.mxu0 0
        %858 = vmatmul.mubr.bf16.gmra.mrb[0].mxu0 %v596
        %v859 = vpop.f32.mrb[0].mxu0
        %v860 = vadd.f32 %v354, %v859
        %v861 = vpop.f32.mrb[0].mxu0
        %v862 = vpop.f32.mrb[0].mxu0
        %v863 = vadd.f32 %v354, %v862
        %v864 = vpop.f32.mrb[0].mxu0
        %865 = vmatprep.mubr.bf16.mxu0 0
        %866 = vmatmul.mubr.bf16.gmra.mrb[0].mxu0 %v599
        %v867 = vpop.f32.mrb[0].mxu0
        %v868 = vadd.f32 %v354, %v867
        %v869 = vpop.f32.mrb[0].mxu0
        %v870 = vpop.f32.mrb[0].mxu0
        %v871 = vadd.f32 %v354, %v870
        %v872 = vpop.f32.mrb[0].mxu0
        %873 = vmatprep.mubr.bf16.mxu0 0
        %874 = vmatmul.mubr.bf16.gmra.mrb[0].mxu0 %v602
        %v875 = vpop.f32.mrb[0].mxu0
        %v876 = vadd.f32 %v354, %v875
        %v877 = vpop.f32.mrb[0].mxu0
        %v878 = vpop.f32.mrb[0].mxu0
        %v879 = vadd.f32 %v354, %v878
        %v880 = vpop.f32.mrb[0].mxu0
        %881 = vmatprep.mubr.bf16.mxu0 0
        %882 = vmatmul.mubr.bf16.gmra.mrb[0].mxu0 %v605
        %v883 = vpop.f32.mrb[0].mxu0
        %v884 = vadd.f32 %v354, %v883
        %v885 = vpop.f32.mrb[0].mxu0
        %v886 = vpop.f32.mrb[0].mxu0
        %v887 = vadd.f32 %v354, %v886
        %v888 = vpop.f32.mrb[0].mxu0
        %889 = vmatprep.mubr.bf16.mxu0 0
        %890 = vmatmul.mubr.bf16.gmra.mrb[0].mxu0 %v608
        %v891 = vpop.f32.mrb[0].mxu0
        %v892 = vadd.f32 %v354, %v891
        %v893 = vpop.f32.mrb[0].mxu0
        %v894 = vpop.f32.mrb[0].mxu0
        %v895 = vadd.f32 %v354, %v894
        %v896 = vpop.f32.mrb[0].mxu0
        %897 = vmatprep.mubr.bf16.mxu0 0
        %898 = vmatmul.mubr.bf16.gmra.mrb[0].mxu0 %v611
        %v899 = vpop.f32.mrb[0].mxu0
        %v900 = vadd.f32 %v354, %v899
        %v901 = vpop.f32.mrb[0].mxu0
        %v902 = vpop.f32.mrb[0].mxu0
        %v903 = vadd.f32 %v354, %v902
        %v904 = vpop.f32.mrb[0].mxu0
        %905 = vdwg.mxu0
        %vm906 = vcmp.ge.f32.partialorder %v652, 0.0
        %vm907 = vcmp.ge.f32.partialorder %v655, 0.0
        %vm908 = vcmp.ge.f32.partialorder %v660, 0.0
        %vm909 = vcmp.ge.f32.partialorder %v663, 0.0
        %vm910 = vcmp.ge.f32.partialorder %v668, 0.0
        %vm911 = vcmp.ge.f32.partialorder %v671, 0.0
        %vm912 = vcmp.ge.f32.partialorder %v676, 0.0
        %vm913 = vcmp.ge.f32.partialorder %v679, 0.0
        %vm914 = vcmp.ge.f32.partialorder %v684, 0.0
        %vm915 = vcmp.ge.f32.partialorder %v687, 0.0
        %vm916 = vcmp.ge.f32.partialorder %v692, 0.0
        %vm917 = vcmp.ge.f32.partialorder %v695, 0.0
        %vm918 = vcmp.ge.f32.partialorder %v700, 0.0
        %vm919 = vcmp.ge.f32.partialorder %v703, 0.0
        %vm920 = vcmp.ge.f32.partialorder %v708, 0.0
        %vm921 = vcmp.ge.f32.partialorder %v711, 0.0
        %vm922 = vcmp.ge.f32.partialorder %v716, 0.0
        %vm923 = vcmp.ge.f32.partialorder %v719, 0.0
        %vm924 = vcmp.ge.f32.partialorder %v724, 0.0
        %vm925 = vcmp.ge.f32.partialorder %v727, 0.0
        %vm926 = vcmp.ge.f32.partialorder %v732, 0.0
        %vm927 = vcmp.ge.f32.partialorder %v735, 0.0
        %vm928 = vcmp.ge.f32.partialorder %v740, 0.0
        %vm929 = vcmp.ge.f32.partialorder %v743, 0.0
        %vm930 = vcmp.ge.f32.partialorder %v748, 0.0
        %vm931 = vcmp.ge.f32.partialorder %v751, 0.0
        %vm932 = vcmp.ge.f32.partialorder %v756, 0.0
        %vm933 = vcmp.ge.f32.partialorder %v759, 0.0
        %vm934 = vcmp.ge.f32.partialorder %v764, 0.0
        %vm935 = vcmp.ge.f32.partialorder %v767, 0.0
        %vm936 = vcmp.ge.f32.partialorder %v772, 0.0
        %vm937 = vcmp.ge.f32.partialorder %v775, 0.0
        %vm938 = vcmp.ge.f32.partialorder %v780, 0.0
        %vm939 = vcmp.ge.f32.partialorder %v783, 0.0
        %vm940 = vcmp.ge.f32.partialorder %v788, 0.0
        %vm941 = vcmp.ge.f32.partialorder %v791, 0.0
        %vm942 = vcmp.ge.f32.partialorder %v796, 0.0
        %vm943 = vcmp.ge.f32.partialorder %v799, 0.0
        %vm944 = vcmp.ge.f32.partialorder %v804, 0.0
        %vm945 = vcmp.ge.f32.partialorder %v807, 0.0
        %vm946 = vcmp.ge.f32.partialorder %v812, 0.0
        %vm947 = vcmp.ge.f32.partialorder %v815, 0.0
        %vm948 = vcmp.ge.f32.partialorder %v820, 0.0
        %vm949 = vcmp.ge.f32.partialorder %v823, 0.0
        %vm950 = vcmp.ge.f32.partialorder %v828, 0.0
        %vm951 = vcmp.ge.f32.partialorder %v831, 0.0
        %vm952 = vcmp.ge.f32.partialorder %v836, 0.0
        %vm953 = vcmp.ge.f32.partialorder %v839, 0.0
        %vm954 = vcmp.ge.f32.partialorder %v844, 0.0
        %vm955 = vcmp.ge.f32.partialorder %v847, 0.0
        %vm956 = vcmp.ge.f32.partialorder %v852, 0.0
        %vm957 = vcmp.ge.f32.partialorder %v855, 0.0
        %vm958 = vcmp.ge.f32.partialorder %v860, 0.0
        %vm959 = vcmp.ge.f32.partialorder %v863, 0.0
        %vm960 = vcmp.ge.f32.partialorder %v868, 0.0
        %vm961 = vcmp.ge.f32.partialorder %v871, 0.0
        %vm962 = vcmp.ge.f32.partialorder %v876, 0.0
        %vm963 = vcmp.ge.f32.partialorder %v879, 0.0
        %vm964 = vcmp.ge.f32.partialorder %v884, 0.0
        %vm965 = vcmp.ge.f32.partialorder %v887, 0.0
        %vm966 = vcmp.ge.f32.partialorder %v892, 0.0
        %vm967 = vcmp.ge.f32.partialorder %v895, 0.0
        %vm968 = vcmp.ge.f32.partialorder %v900, 0.0
        %vm969 = vcmp.ge.f32.partialorder %v903, 0.0
        %v970 = vmul.f32 %v652, 0.01
        %v971 = vmul.f32 %v655, 0.01
        %v972 = vmul.f32 %v660, 0.01
        %v973 = vmul.f32 %v663, 0.01
        %v974 = vmul.f32 %v668, 0.01
        %v975 = vmul.f32 %v671, 0.01
        %v976 = vmul.f32 %v676, 0.01
        %v977 = vmul.f32 %v679, 0.01
        %v978 = vmul.f32 %v684, 0.01
        %v979 = vmul.f32 %v687, 0.01
        %v980 = vmul.f32 %v692, 0.01
        %v981 = vmul.f32 %v695, 0.01
        %v982 = vmul.f32 %v700, 0.01
        %v983 = vmul.f32 %v703, 0.01
        %v984 = vmul.f32 %v708, 0.01
        %v985 = vmul.f32 %v711, 0.01
        %v986 = vmul.f32 %v716, 0.01
        %v987 = vmul.f32 %v719, 0.01
        %v988 = vmul.f32 %v724, 0.01
        %v989 = vmul.f32 %v727, 0.01
        %v990 = vmul.f32 %v732, 0.01
        %v991 = vmul.f32 %v735, 0.01
        %v992 = vmul.f32 %v740, 0.01
        %v993 = vmul.f32 %v743, 0.01
        %v994 = vmul.f32 %v748, 0.01
        %v995 = vmul.f32 %v751, 0.01
        %v996 = vmul.f32 %v756, 0.01
        %v997 = vmul.f32 %v759, 0.01
        %v998 = vmul.f32 %v764, 0.01
        %v999 = vmul.f32 %v767, 0.01
        %v1000 = vmul.f32 %v772, 0.01
        %v1001 = vmul.f32 %v775, 0.01
        %v1002 = vmul.f32 %v780, 0.01
        %v1003 = vmul.f32 %v783, 0.01
        %v1004 = vmul.f32 %v788, 0.01
        %v1005 = vmul.f32 %v791, 0.01
        %v1006 = vmul.f32 %v796, 0.01
        %v1007 = vmul.f32 %v799, 0.01
        %v1008 = vmul.f32 %v804, 0.01
        %v1009 = vmul.f32 %v807, 0.01
        %v1010 = vmul.f32 %v812, 0.01
        %v1011 = vmul.f32 %v815, 0.01
        %v1012 = vmul.f32 %v820, 0.01
        %v1013 = vmul.f32 %v823, 0.01
        %v1014 = vmul.f32 %v828, 0.01
        %v1015 = vmul.f32 %v831, 0.01
        %v1016 = vmul.f32 %v836, 0.01
        %v1017 = vmul.f32 %v839, 0.01
        %v1018 = vmul.f32 %v844, 0.01
        %v1019 = vmul.f32 %v847, 0.01
        %v1020 = vmul.f32 %v852, 0.01
        %v1021 = vmul.f32 %v855, 0.01
        %v1022 = vmul.f32 %v860, 0.01
        %v1023 = vmul.f32 %v863, 0.01
        %v1024 = vmul.f32 %v868, 0.01
        %v1025 = vmul.f32 %v871, 0.01
        %v1026 = vmul.f32 %v876, 0.01
        %v1027 = vmul.f32 %v879, 0.01
        %v1028 = vmul.f32 %v884, 0.01
        %v1029 = vmul.f32 %v887, 0.01
        %v1030 = vmul.f32 %v892, 0.01
        %v1031 = vmul.f32 %v895, 0.01
        %v1032 = vmul.f32 %v900, 0.01
        %v1033 = vmul.f32 %v903, 0.01
        %v1034 = vsel %vm906, %v652, %v970
        %v1035 = vsel %vm907, %v655, %v971
        %v1036 = vsel %vm908, %v660, %v972
        %v1037 = vsel %vm909, %v663, %v973
        %v1038 = vsel %vm910, %v668, %v974
        %v1039 = vsel %vm911, %v671, %v975
        %v1040 = vsel %vm912, %v676, %v976
        %v1041 = vsel %vm913, %v679, %v977
        %v1042 = vsel %vm914, %v684, %v978
        %v1043 = vsel %vm915, %v687, %v979
        %v1044 = vsel %vm916, %v692, %v980
        %v1045 = vsel %vm917, %v695, %v981
        %v1046 = vsel %vm918, %v700, %v982
        %v1047 = vsel %vm919, %v703, %v983
        %v1048 = vsel %vm920, %v708, %v984
        %v1049 = vsel %vm921, %v711, %v985
        %v1050 = vsel %vm922, %v716, %v986
        %v1051 = vsel %vm923, %v719, %v987
        %v1052 = vsel %vm924, %v724, %v988
        %v1053 = vsel %vm925, %v727, %v989
        %v1054 = vsel %vm926, %v732, %v990
        %v1055 = vsel %vm927, %v735, %v991
        %v1056 = vsel %vm928, %v740, %v992
        %v1057 = vsel %vm929, %v743, %v993
        %v1058 = vsel %vm930, %v748, %v994
        %v1059 = vsel %vm931, %v751, %v995
        %v1060 = vsel %vm932, %v756, %v996
        %v1061 = vsel %vm933, %v759, %v997
        %v1062 = vsel %vm934, %v764, %v998
        %v1063 = vsel %vm935, %v767, %v999
        %v1064 = vsel %vm936, %v772, %v1000
        %v1065 = vsel %vm937, %v775, %v1001
        %v1066 = vsel %vm938, %v780, %v1002
        %v1067 = vsel %vm939, %v783, %v1003
        %v1068 = vsel %vm940, %v788, %v1004
        %v1069 = vsel %vm941, %v791, %v1005
        %v1070 = vsel %vm942, %v796, %v1006
        %v1071 = vsel %vm943, %v799, %v1007
        %v1072 = vsel %vm944, %v804, %v1008
        %v1073 = vsel %vm945, %v807, %v1009
        %v1074 = vsel %vm946, %v812, %v1010
        %v1075 = vsel %vm947, %v815, %v1011
        %v1076 = vsel %vm948, %v820, %v1012
        %v1077 = vsel %vm949, %v823, %v1013
        %v1078 = vsel %vm950, %v828, %v1014
        %v1079 = vsel %vm951, %v831, %v1015
        %v1080 = vsel %vm952, %v836, %v1016
        %v1081 = vsel %vm953, %v839, %v1017
        %v1082 = vsel %vm954, %v844, %v1018
        %v1083 = vsel %vm955, %v847, %v1019
        %v1084 = vsel %vm956, %v852, %v1020
        %v1085 = vsel %vm957, %v855, %v1021
        %v1086 = vsel %vm958, %v860, %v1022
        %v1087 = vsel %vm959, %v863, %v1023
        %v1088 = vsel %vm960, %v868, %v1024
        %v1089 = vsel %vm961, %v871, %v1025
        %v1090 = vsel %vm962, %v876, %v1026
        %v1091 = vsel %vm963, %v879, %v1027
        %v1092 = vsel %vm964, %v884, %v1028
        %v1093 = vsel %vm965, %v887, %v1029
        %v1094 = vsel %vm966, %v892, %v1030
        %v1095 = vsel %vm967, %v895, %v1031
        %v1096 = vsel %vm968, %v900, %v1032
        %v1097 = vsel %vm969, %v903, %v1033
        %p1098 = scmp.eq.s32.totalorder %s28, 0
        // Predicated region
        $region33: #{tpu_custom_call.1} parent=31 // pred_check
          %p1099 = pneg %p1098
        $region34: #{tpu_custom_call.1} parent=31 // pred_check_branch
          %1101 = sbr.rel (%p1099) target = $region36
        $region35: #{tpu_custom_call.1} parent=31 // pred_region
          %vm1102 = vcmask 24576
          %1103 = vst.msk [vmem:[%s256] sm:$0x1] %vm1102, 0.0
          %1104 = vst.msk [vmem:[%s262] sm:$0x1] %vm1102, 0.0
        $region36: #{tpu_custom_call.1} parent=31 // pred_fallthru
          _
        %v1105 = vld [vmem:[%s256] sm:$0x1]
        %vm1106 = vcmask 31744
        %v1107 = vsel %vm1106, %v1034, 0.0
        %v1108 = vsel %vm1106, %v1035, 0.0
        %v1109 = vadd.f32 %v1107, %v1108
        %v1110 = vsel %vm1106, %v1036, 0.0
        %v1111 = vadd.f32 %v1109, %v1110
        %v1112 = vsel %vm1106, %v1037, 0.0
        %v1113 = vadd.f32 %v1111, %v1112
        %v1114 = vsel %vm1106, %v1038, 0.0
        %v1115 = vadd.f32 %v1113, %v1114
        %v1116 = vsel %vm1106, %v1039, 0.0
        %v1117 = vadd.f32 %v1115, %v1116
        %v1118 = vsel %vm1106, %v1040, 0.0
        %v1119 = vadd.f32 %v1117, %v1118
        %v1120 = vsel %vm1106, %v1041, 0.0
        %v1121 = vadd.f32 %v1119, %v1120
        %v1122 = vsel %vm1106, %v1042, 0.0
        %v1123 = vadd.f32 %v1121, %v1122
        %v1124 = vsel %vm1106, %v1043, 0.0
        %v1125 = vadd.f32 %v1123, %v1124
        %v1126 = vsel %vm1106, %v1044, 0.0
        %v1127 = vadd.f32 %v1125, %v1126
        %v1128 = vsel %vm1106, %v1045, 0.0
        %v1129 = vadd.f32 %v1127, %v1128
        %v1130 = vsel %vm1106, %v1046, 0.0
        %v1131 = vadd.f32 %v1129, %v1130
        %v1132 = vsel %vm1106, %v1047, 0.0
        %v1133 = vadd.f32 %v1131, %v1132
        %v1134 = vsel %vm1106, %v1048, 0.0
        %v1135 = vadd.f32 %v1133, %v1134
        %v1136 = vsel %vm1106, %v1049, 0.0
        %v1137 = vadd.f32 %v1135, %v1136
        %v1138 = vsel %vm1106, %v1050, 0.0
        %v1139 = vadd.f32 %v1137, %v1138
        %v1140 = vsel %vm1106, %v1051, 0.0
        %v1141 = vadd.f32 %v1139, %v1140
        %v1142 = vsel %vm1106, %v1052, 0.0
        %v1143 = vadd.f32 %v1141, %v1142
        %v1144 = vsel %vm1106, %v1053, 0.0
        %v1145 = vadd.f32 %v1143, %v1144
        %v1146 = vsel %vm1106, %v1054, 0.0
        %v1147 = vadd.f32 %v1145, %v1146
        %v1148 = vsel %vm1106, %v1055, 0.0
        %v1149 = vadd.f32 %v1147, %v1148
        %v1150 = vsel %vm1106, %v1056, 0.0
        %v1151 = vadd.f32 %v1149, %v1150
        %v1152 = vsel %vm1106, %v1057, 0.0
        %v1153 = vadd.f32 %v1151, %v1152
        %v1154 = vsel %vm1106, %v1058, 0.0
        %v1155 = vadd.f32 %v1153, %v1154
        %v1156 = vsel %vm1106, %v1059, 0.0
        %v1157 = vadd.f32 %v1155, %v1156
        %v1158 = vsel %vm1106, %v1060, 0.0
        %v1159 = vadd.f32 %v1157, %v1158
        %v1160 = vsel %vm1106, %v1061, 0.0
        %v1161 = vadd.f32 %v1159, %v1160
        %v1162 = vsel %vm1106, %v1062, 0.0
        %v1163 = vadd.f32 %v1161, %v1162
        %v1164 = vsel %vm1106, %v1063, 0.0
        %v1165 = vadd.f32 %v1163, %v1164
        %v1166 = vsel %vm1106, %v1064, 0.0
        %v1167 = vadd.f32 %v1165, %v1166
        %v1168 = vsel %vm1106, %v1065, 0.0
        %v1169 = vadd.f32 %v1167, %v1168
        %v1170 = vsel %vm1106, %v1066, 0.0
        %v1171 = vadd.f32 %v1169, %v1170
        %v1172 = vsel %vm1106, %v1067, 0.0
        %v1173 = vadd.f32 %v1171, %v1172
        %v1174 = vsel %vm1106, %v1068, 0.0
        %v1175 = vadd.f32 %v1173, %v1174
        %v1176 = vsel %vm1106, %v1069, 0.0
        %v1177 = vadd.f32 %v1175, %v1176
        %v1178 = vsel %vm1106, %v1070, 0.0
        %v1179 = vadd.f32 %v1177, %v1178
        %v1180 = vsel %vm1106, %v1071, 0.0
        %v1181 = vadd.f32 %v1179, %v1180
        %v1182 = vsel %vm1106, %v1072, 0.0
        %v1183 = vadd.f32 %v1181, %v1182
        %v1184 = vsel %vm1106, %v1073, 0.0
        %v1185 = vadd.f32 %v1183, %v1184
        %v1186 = vsel %vm1106, %v1074, 0.0
        %v1187 = vadd.f32 %v1185, %v1186
        %v1188 = vsel %vm1106, %v1075, 0.0
        %v1189 = vadd.f32 %v1187, %v1188
        %v1190 = vsel %vm1106, %v1076, 0.0
        %v1191 = vadd.f32 %v1189, %v1190
        %v1192 = vsel %vm1106, %v1077, 0.0
        %v1193 = vadd.f32 %v1191, %v1192
        %v1194 = vsel %vm1106, %v1078, 0.0
        %v1195 = vadd.f32 %v1193, %v1194
        %v1196 = vsel %vm1106, %v1079, 0.0
        %v1197 = vadd.f32 %v1195, %v1196
        %v1198 = vsel %vm1106, %v1080, 0.0
        %v1199 = vadd.f32 %v1197, %v1198
        %v1200 = vsel %vm1106, %v1081, 0.0
        %v1201 = vadd.f32 %v1199, %v1200
        %v1202 = vsel %vm1106, %v1082, 0.0
        %v1203 = vadd.f32 %v1201, %v1202
        %v1204 = vsel %vm1106, %v1083, 0.0
        %v1205 = vadd.f32 %v1203, %v1204
        %v1206 = vsel %vm1106, %v1084, 0.0
        %v1207 = vadd.f32 %v1205, %v1206
        %v1208 = vsel %vm1106, %v1085, 0.0
        %v1209 = vadd.f32 %v1207, %v1208
        %v1210 = vsel %vm1106, %v1086, 0.0
        %v1211 = vadd.f32 %v1209, %v1210
        %v1212 = vsel %vm1106, %v1087, 0.0
        %v1213 = vadd.f32 %v1211, %v1212
        %v1214 = vsel %vm1106, %v1088, 0.0
        %v1215 = vadd.f32 %v1213, %v1214
        %v1216 = vsel %vm1106, %v1089, 0.0
        %v1217 = vadd.f32 %v1215, %v1216
        %v1218 = vsel %vm1106, %v1090, 0.0
        %v1219 = vadd.f32 %v1217, %v1218
        %v1220 = vsel %vm1106, %v1091, 0.0
        %v1221 = vadd.f32 %v1219, %v1220
        %v1222 = vsel %vm1106, %v1092, 0.0
        %v1223 = vadd.f32 %v1221, %v1222
        %v1224 = vsel %vm1106, %v1093, 0.0
        %v1225 = vadd.f32 %v1223, %v1224
        %v1226 = vsel %vm1106, %v1094, 0.0
        %v1227 = vadd.f32 %v1225, %v1226
        %v1228 = vsel %vm1106, %v1095, 0.0
        %v1229 = vadd.f32 %v1227, %v1228
        %v1230 = vsel %vm1106, %v1096, 0.0
        %v1231 = vadd.f32 %v1229, %v1230
        %v1232 = vsel %vm1106, %v1097, 0.0
        %v1233 = vadd.f32 %v1231, %v1232
        %v1234 = vrot.slane %v1233, 4
        %v1235 = vadd.f32 %v1233, %v1234
        %v1236 = vrot.slane %v1235, 2
        %v1237 = vadd.f32 %v1235, %v1236
        %v1238 = vrot.slane %v1237, 1
        %v1239 = vadd.f32 %v1237, %v1238
        %v1240 = vadd.f32 %v1105, %v1239
        %vm1241 = vcmask 24576
        %1242 = vst.msk [vmem:[%s256] sm:$0x1] %vm1241, %v1240
        %v1243 = vld [vmem:[%s262] sm:$0x1]
        %v1244 = vmul.f32 %v1034, %v1034
        %v1245 = vmul.f32 %v1035, %v1035
        %v1246 = vmul.f32 %v1036, %v1036
        %v1247 = vmul.f32 %v1037, %v1037
        %v1248 = vmul.f32 %v1038, %v1038
        %v1249 = vmul.f32 %v1039, %v1039
        %v1250 = vmul.f32 %v1040, %v1040
        %v1251 = vmul.f32 %v1041, %v1041
        %v1252 = vmul.f32 %v1042, %v1042
        %v1253 = vmul.f32 %v1043, %v1043
        %v1254 = vmul.f32 %v1044, %v1044
        %v1255 = vmul.f32 %v1045, %v1045
        %v1256 = vmul.f32 %v1046, %v1046
        %v1257 = vmul.f32 %v1047, %v1047
        %v1258 = vmul.f32 %v1048, %v1048
        %v1259 = vmul.f32 %v1049, %v1049
        %v1260 = vmul.f32 %v1050, %v1050
        %v1261 = vmul.f32 %v1051, %v1051
        %v1262 = vmul.f32 %v1052, %v1052
        %v1263 = vmul.f32 %v1053, %v1053
        %v1264 = vmul.f32 %v1054, %v1054
        %v1265 = vmul.f32 %v1055, %v1055
        %v1266 = vmul.f32 %v1056, %v1056
        %v1267 = vmul.f32 %v1057, %v1057
        %v1268 = vmul.f32 %v1058, %v1058
        %v1269 = vmul.f32 %v1059, %v1059
        %v1270 = vmul.f32 %v1060, %v1060
        %v1271 = vmul.f32 %v1061, %v1061
        %v1272 = vmul.f32 %v1062, %v1062
        %v1273 = vmul.f32 %v1063, %v1063
        %v1274 = vmul.f32 %v1064, %v1064
        %v1275 = vmul.f32 %v1065, %v1065
        %v1276 = vmul.f32 %v1066, %v1066
        %v1277 = vmul.f32 %v1067, %v1067
        %v1278 = vmul.f32 %v1068, %v1068
        %v1279 = vmul.f32 %v1069, %v1069
        %v1280 = vmul.f32 %v1070, %v1070
        %v1281 = vmul.f32 %v1071, %v1071
        %v1282 = vmul.f32 %v1072, %v1072
        %v1283 = vmul.f32 %v1073, %v1073
        %v1284 = vmul.f32 %v1074, %v1074
        %v1285 = vmul.f32 %v1075, %v1075
        %v1286 = vmul.f32 %v1076, %v1076
        %v1287 = vmul.f32 %v1077, %v1077
        %v1288 = vmul.f32 %v1078, %v1078
        %v1289 = vmul.f32 %v1079, %v1079
        %v1290 = vmul.f32 %v1080, %v1080
        %v1291 = vmul.f32 %v1081, %v1081
        %v1292 = vmul.f32 %v1082, %v1082
        %v1293 = vmul.f32 %v1083, %v1083
        %v1294 = vmul.f32 %v1084, %v1084
        %v1295 = vmul.f32 %v1085, %v1085
        %v1296 = vmul.f32 %v1086, %v1086
        %v1297 = vmul.f32 %v1087, %v1087
        %v1298 = vmul.f32 %v1088, %v1088
        %v1299 = vmul.f32 %v1089, %v1089
        %v1300 = vmul.f32 %v1090, %v1090
        %v1301 = vmul.f32 %v1091, %v1091
        %v1302 = vmul.f32 %v1092, %v1092
        %v1303 = vmul.f32 %v1093, %v1093
        %v1304 = vmul.f32 %v1094, %v1094
        %v1305 = vmul.f32 %v1095, %v1095
        %v1306 = vmul.f32 %v1096, %v1096
        %v1307 = vmul.f32 %v1097, %v1097
        %v1308 = vsel %vm1106, %v1244, 0.0
        %v1309 = vsel %vm1106, %v1245, 0.0
        %v1310 = vadd.f32 %v1308, %v1309
        %v1311 = vsel %vm1106, %v1246, 0.0
        %v1312 = vadd.f32 %v1310, %v1311
        %v1313 = vsel %vm1106, %v1247, 0.0
        %v1314 = vadd.f32 %v1312, %v1313
        %v1315 = vsel %vm1106, %v1248, 0.0
        %v1316 = vadd.f32 %v1314, %v1315
        %v1317 = vsel %vm1106, %v1249, 0.0
        %v1318 = vadd.f32 %v1316, %v1317
        %v1319 = vsel %vm1106, %v1250, 0.0
        %v1320 = vadd.f32 %v1318, %v1319
        %v1321 = vsel %vm1106, %v1251, 0.0
        %v1322 = vadd.f32 %v1320, %v1321
        %v1323 = vsel %vm1106, %v1252, 0.0
        %v1324 = vadd.f32 %v1322, %v1323
        %v1325 = vsel %vm1106, %v1253, 0.0
        %v1326 = vadd.f32 %v1324, %v1325
        %v1327 = vsel %vm1106, %v1254, 0.0
        %v1328 = vadd.f32 %v1326, %v1327
        %v1329 = vsel %vm1106, %v1255, 0.0
        %v1330 = vadd.f32 %v1328, %v1329
        %v1331 = vsel %vm1106, %v1256, 0.0
        %v1332 = vadd.f32 %v1330, %v1331
        %v1333 = vsel %vm1106, %v1257, 0.0
        %v1334 = vadd.f32 %v1332, %v1333
        %v1335 = vsel %vm1106, %v1258, 0.0
        %v1336 = vadd.f32 %v1334, %v1335
        %v1337 = vsel %vm1106, %v1259, 0.0
        %v1338 = vadd.f32 %v1336, %v1337
        %v1339 = vsel %vm1106, %v1260, 0.0
        %v1340 = vadd.f32 %v1338, %v1339
        %v1341 = vsel %vm1106, %v1261, 0.0
        %v1342 = vadd.f32 %v1340, %v1341
        %v1343 = vsel %vm1106, %v1262, 0.0
        %v1344 = vadd.f32 %v1342, %v1343
        %v1345 = vsel %vm1106, %v1263, 0.0
        %v1346 = vadd.f32 %v1344, %v1345
        %v1347 = vsel %vm1106, %v1264, 0.0
        %v1348 = vadd.f32 %v1346, %v1347
        %v1349 = vsel %vm1106, %v1265, 0.0
        %v1350 = vadd.f32 %v1348, %v1349
        %v1351 = vsel %vm1106, %v1266, 0.0
        %v1352 = vadd.f32 %v1350, %v1351
        %v1353 = vsel %vm1106, %v1267, 0.0
        %v1354 = vadd.f32 %v1352, %v1353
        %v1355 = vsel %vm1106, %v1268, 0.0
        %v1356 = vadd.f32 %v1354, %v1355
        %v1357 = vsel %vm1106, %v1269, 0.0
        %v1358 = vadd.f32 %v1356, %v1357
        %v1359 = vsel %vm1106, %v1270, 0.0
        %v1360 = vadd.f32 %v1358, %v1359
        %v1361 = vsel %vm1106, %v1271, 0.0
        %v1362 = vadd.f32 %v1360, %v1361
        %v1363 = vsel %vm1106, %v1272, 0.0
        %v1364 = vadd.f32 %v1362, %v1363
        %v1365 = vsel %vm1106, %v1273, 0.0
        %v1366 = vadd.f32 %v1364, %v1365
        %v1367 = vsel %vm1106, %v1274, 0.0
        %v1368 = vadd.f32 %v1366, %v1367
        %v1369 = vsel %vm1106, %v1275, 0.0
        %v1370 = vadd.f32 %v1368, %v1369
        %v1371 = vsel %vm1106, %v1276, 0.0
        %v1372 = vadd.f32 %v1370, %v1371
        %v1373 = vsel %vm1106, %v1277, 0.0
        %v1374 = vadd.f32 %v1372, %v1373
        %v1375 = vsel %vm1106, %v1278, 0.0
        %v1376 = vadd.f32 %v1374, %v1375
        %v1377 = vsel %vm1106, %v1279, 0.0
        %v1378 = vadd.f32 %v1376, %v1377
        %v1379 = vsel %vm1106, %v1280, 0.0
        %v1380 = vadd.f32 %v1378, %v1379
        %v1381 = vsel %vm1106, %v1281, 0.0
        %v1382 = vadd.f32 %v1380, %v1381
        %v1383 = vsel %vm1106, %v1282, 0.0
        %v1384 = vadd.f32 %v1382, %v1383
        %v1385 = vsel %vm1106, %v1283, 0.0
        %v1386 = vadd.f32 %v1384, %v1385
        %v1387 = vsel %vm1106, %v1284, 0.0
        %v1388 = vadd.f32 %v1386, %v1387
        %v1389 = vsel %vm1106, %v1285, 0.0
        %v1390 = vadd.f32 %v1388, %v1389
        %v1391 = vsel %vm1106, %v1286, 0.0
        %v1392 = vadd.f32 %v1390, %v1391
        %v1393 = vsel %vm1106, %v1287, 0.0
        %v1394 = vadd.f32 %v1392, %v1393
        %v1395 = vsel %vm1106, %v1288, 0.0
        %v1396 = vadd.f32 %v1394, %v1395
        %v1397 = vsel %vm1106, %v1289, 0.0
        %v1398 = vadd.f32 %v1396, %v1397
        %v1399 = vsel %vm1106, %v1290, 0.0
        %v1400 = vadd.f32 %v1398, %v1399
        %v1401 = vsel %vm1106, %v1291, 0.0
        %v1402 = vadd.f32 %v1400, %v1401
        %v1403 = vsel %vm1106, %v1292, 0.0
        %v1404 = vadd.f32 %v1402, %v1403
        %v1405 = vsel %vm1106, %v1293, 0.0
        %v1406 = vadd.f32 %v1404, %v1405
        %v1407 = vsel %vm1106, %v1294, 0.0
        %v1408 = vadd.f32 %v1406, %v1407
        %v1409 = vsel %vm1106, %v1295, 0.0
        %v1410 = vadd.f32 %v1408, %v1409
        %v1411 = vsel %vm1106, %v1296, 0.0
        %v1412 = vadd.f32 %v1410, %v1411
        %v1413 = vsel %vm1106, %v1297, 0.0
        %v1414 = vadd.f32 %v1412, %v1413
        %v1415 = vsel %vm1106, %v1298, 0.0
        %v1416 = vadd.f32 %v1414, %v1415
        %v1417 = vsel %vm1106, %v1299, 0.0
        %v1418 = vadd.f32 %v1416, %v1417
        %v1419 = vsel %vm1106, %v1300, 0.0
        %v1420 = vadd.f32 %v1418, %v1419
        %v1421 = vsel %vm1106, %v1301, 0.0
        %v1422 = vadd.f32 %v1420, %v1421
        %v1423 = vsel %vm1106, %v1302, 0.0
        %v1424 = vadd.f32 %v1422, %v1423
        %v1425 = vsel %vm1106, %v1303, 0.0
        %v1426 = vadd.f32 %v1424, %v1425
        %v1427 = vsel %vm1106, %v1304, 0.0
        %v1428 = vadd.f32 %v1426, %v1427
        %v1429 = vsel %vm1106, %v1305, 0.0
        %v1430 = vadd.f32 %v1428, %v1429
        %v1431 = vsel %vm1106, %v1306, 0.0
        %v1432 = vadd.f32 %v1430, %v1431
        %v1433 = vsel %vm1106, %v1307, 0.0
        %v1434 = vadd.f32 %v1432, %v1433
        %v1435 = vrot.slane %v1434, 4
        %v1436 = vadd.f32 %v1434, %v1435
        %v1437 = vrot.slane %v1436, 2
        %v1438 = vadd.f32 %v1436, %v1437
        %v1439 = vrot.slane %v1438, 1
        %v1440 = vadd.f32 %v1438, %v1439
        %v1441 = vadd.f32 %v1243, %v1440
        %1442 = vst.msk [vmem:[%s262] sm:$0x1] %vm1241, %v1441
        %v1443 = vrot.slane %v1107, 4
        %v1444 = vadd.f32 %v1107, %v1443
        %v1445 = vrot.slane %v1444, 2
        %v1446 = vadd.f32 %v1444, %v1445
        %v1447 = vrot.slane %v1446, 1
        %v1448 = vadd.f32 %v1446, %v1447
        %v1449 = vrot.slane %v1108, 4
        %v1450 = vadd.f32 %v1108, %v1449
        %v1451 = vrot.slane %v1450, 2
        %v1452 = vadd.f32 %v1450, %v1451
        %v1453 = vrot.slane %v1452, 1
        %v1454 = vadd.f32 %v1452, %v1453
        %v1455 = vrot.slane %v1110, 4
        %v1456 = vadd.f32 %v1110, %v1455
        %v1457 = vrot.slane %v1456, 2
        %v1458 = vadd.f32 %v1456, %v1457
        %v1459 = vrot.slane %v1458, 1
        %v1460 = vadd.f32 %v1458, %v1459
        %v1461 = vrot.slane %v1112, 4
        %v1462 = vadd.f32 %v1112, %v1461
        %v1463 = vrot.slane %v1462, 2
        %v1464 = vadd.f32 %v1462, %v1463
        %v1465 = vrot.slane %v1464, 1
        %v1466 = vadd.f32 %v1464, %v1465
        %v1467 = vrot.slane %v1114, 4
        %v1468 = vadd.f32 %v1114, %v1467
        %v1469 = vrot.slane %v1468, 2
        %v1470 = vadd.f32 %v1468, %v1469
        %v1471 = vrot.slane %v1470, 1
        %v1472 = vadd.f32 %v1470, %v1471
        %v1473 = vrot.slane %v1116, 4
        %v1474 = vadd.f32 %v1116, %v1473
        %v1475 = vrot.slane %v1474, 2
        %v1476 = vadd.f32 %v1474, %v1475
        %v1477 = vrot.slane %v1476, 1
        %v1478 = vadd.f32 %v1476, %v1477
        %v1479 = vrot.slane %v1118, 4
        %v1480 = vadd.f32 %v1118, %v1479
        %v1481 = vrot.slane %v1480, 2
        %v1482 = vadd.f32 %v1480, %v1481
        %v1483 = vrot.slane %v1482, 1
        %v1484 = vadd.f32 %v1482, %v1483
        %v1485 = vrot.slane %v1120, 4
        %v1486 = vadd.f32 %v1120, %v1485
        %v1487 = vrot.slane %v1486, 2
        %v1488 = vadd.f32 %v1486, %v1487
        %v1489 = vrot.slane %v1488, 1
        %v1490 = vadd.f32 %v1488, %v1489
        %v1491 = vrot.slane %v1122, 4
        %v1492 = vadd.f32 %v1122, %v1491
        %v1493 = vrot.slane %v1492, 2
        %v1494 = vadd.f32 %v1492, %v1493
        %v1495 = vrot.slane %v1494, 1
        %v1496 = vadd.f32 %v1494, %v1495
        %v1497 = vrot.slane %v1124, 4
        %v1498 = vadd.f32 %v1124, %v1497
        %v1499 = vrot.slane %v1498, 2
        %v1500 = vadd.f32 %v1498, %v1499
        %v1501 = vrot.slane %v1500, 1
        %v1502 = vadd.f32 %v1500, %v1501
        %v1503 = vrot.slane %v1126, 4
        %v1504 = vadd.f32 %v1126, %v1503
        %v1505 = vrot.slane %v1504, 2
        %v1506 = vadd.f32 %v1504, %v1505
        %v1507 = vrot.slane %v1506, 1
        %v1508 = vadd.f32 %v1506, %v1507
        %v1509 = vrot.slane %v1128, 4
        %v1510 = vadd.f32 %v1128, %v1509
        %v1511 = vrot.slane %v1510, 2
        %v1512 = vadd.f32 %v1510, %v1511
        %v1513 = vrot.slane %v1512, 1
        %v1514 = vadd.f32 %v1512, %v1513
        %v1515 = vrot.slane %v1130, 4
        %v1516 = vadd.f32 %v1130, %v1515
        %v1517 = vrot.slane %v1516, 2
        %v1518 = vadd.f32 %v1516, %v1517
        %v1519 = vrot.slane %v1518, 1
        %v1520 = vadd.f32 %v1518, %v1519
        %v1521 = vrot.slane %v1132, 4
        %v1522 = vadd.f32 %v1132, %v1521
        %v1523 = vrot.slane %v1522, 2
        %v1524 = vadd.f32 %v1522, %v1523
        %v1525 = vrot.slane %v1524, 1
        %v1526 = vadd.f32 %v1524, %v1525
        %v1527 = vrot.slane %v1134, 4
        %v1528 = vadd.f32 %v1134, %v1527
        %v1529 = vrot.slane %v1528, 2
        %v1530 = vadd.f32 %v1528, %v1529
        %v1531 = vrot.slane %v1530, 1
        %v1532 = vadd.f32 %v1530, %v1531
        %v1533 = vrot.slane %v1136, 4
        %v1534 = vadd.f32 %v1136, %v1533
        %v1535 = vrot.slane %v1534, 2
        %v1536 = vadd.f32 %v1534, %v1535
        %v1537 = vrot.slane %v1536, 1
        %v1538 = vadd.f32 %v1536, %v1537
        %v1539 = vrot.slane %v1138, 4
        %v1540 = vadd.f32 %v1138, %v1539
        %v1541 = vrot.slane %v1540, 2
        %v1542 = vadd.f32 %v1540, %v1541
        %v1543 = vrot.slane %v1542, 1
        %v1544 = vadd.f32 %v1542, %v1543
        %v1545 = vrot.slane %v1140, 4
        %v1546 = vadd.f32 %v1140, %v1545
        %v1547 = vrot.slane %v1546, 2
        %v1548 = vadd.f32 %v1546, %v1547
        %v1549 = vrot.slane %v1548, 1
        %v1550 = vadd.f32 %v1548, %v1549
        %v1551 = vrot.slane %v1142, 4
        %v1552 = vadd.f32 %v1142, %v1551
        %v1553 = vrot.slane %v1552, 2
        %v1554 = vadd.f32 %v1552, %v1553
        %v1555 = vrot.slane %v1554, 1
        %v1556 = vadd.f32 %v1554, %v1555
        %v1557 = vrot.slane %v1144, 4
        %v1558 = vadd.f32 %v1144, %v1557
        %v1559 = vrot.slane %v1558, 2
        %v1560 = vadd.f32 %v1558, %v1559
        %v1561 = vrot.slane %v1560, 1
        %v1562 = vadd.f32 %v1560, %v1561
        %v1563 = vrot.slane %v1146, 4
        %v1564 = vadd.f32 %v1146, %v1563
        %v1565 = vrot.slane %v1564, 2
        %v1566 = vadd.f32 %v1564, %v1565
        %v1567 = vrot.slane %v1566, 1
        %v1568 = vadd.f32 %v1566, %v1567
        %v1569 = vrot.slane %v1148, 4
        %v1570 = vadd.f32 %v1148, %v1569
        %v1571 = vrot.slane %v1570, 2
        %v1572 = vadd.f32 %v1570, %v1571
        %v1573 = vrot.slane %v1572, 1
        %v1574 = vadd.f32 %v1572, %v1573
        %v1575 = vrot.slane %v1150, 4
        %v1576 = vadd.f32 %v1150, %v1575
        %v1577 = vrot.slane %v1576, 2
        %v1578 = vadd.f32 %v1576, %v1577
        %v1579 = vrot.slane %v1578, 1
        %v1580 = vadd.f32 %v1578, %v1579
        %v1581 = vrot.slane %v1152, 4
        %v1582 = vadd.f32 %v1152, %v1581
        %v1583 = vrot.slane %v1582, 2
        %v1584 = vadd.f32 %v1582, %v1583
        %v1585 = vrot.slane %v1584, 1
        %v1586 = vadd.f32 %v1584, %v1585
        %v1587 = vrot.slane %v1154, 4
        %v1588 = vadd.f32 %v1154, %v1587
        %v1589 = vrot.slane %v1588, 2
        %v1590 = vadd.f32 %v1588, %v1589
        %v1591 = vrot.slane %v1590, 1
        %v1592 = vadd.f32 %v1590, %v1591
        %v1593 = vrot.slane %v1156, 4
        %v1594 = vadd.f32 %v1156, %v1593
        %v1595 = vrot.slane %v1594, 2
        %v1596 = vadd.f32 %v1594, %v1595
        %v1597 = vrot.slane %v1596, 1
        %v1598 = vadd.f32 %v1596, %v1597
        %v1599 = vrot.slane %v1158, 4
        %v1600 = vadd.f32 %v1158, %v1599
        %v1601 = vrot.slane %v1600, 2
        %v1602 = vadd.f32 %v1600, %v1601
        %v1603 = vrot.slane %v1602, 1
        %v1604 = vadd.f32 %v1602, %v1603
        %v1605 = vrot.slane %v1160, 4
        %v1606 = vadd.f32 %v1160, %v1605
        %v1607 = vrot.slane %v1606, 2
        %v1608 = vadd.f32 %v1606, %v1607
        %v1609 = vrot.slane %v1608, 1
        %v1610 = vadd.f32 %v1608, %v1609
        %v1611 = vrot.slane %v1162, 4
        %v1612 = vadd.f32 %v1162, %v1611
        %v1613 = vrot.slane %v1612, 2
        %v1614 = vadd.f32 %v1612, %v1613
        %v1615 = vrot.slane %v1614, 1
        %v1616 = vadd.f32 %v1614, %v1615
        %v1617 = vrot.slane %v1164, 4
        %v1618 = vadd.f32 %v1164, %v1617
        %v1619 = vrot.slane %v1618, 2
        %v1620 = vadd.f32 %v1618, %v1619
        %v1621 = vrot.slane %v1620, 1
        %v1622 = vadd.f32 %v1620, %v1621
        %v1623 = vrot.slane %v1166, 4
        %v1624 = vadd.f32 %v1166, %v1623
        %v1625 = vrot.slane %v1624, 2
        %v1626 = vadd.f32 %v1624, %v1625
        %v1627 = vrot.slane %v1626, 1
        %v1628 = vadd.f32 %v1626, %v1627
        %v1629 = vrot.slane %v1168, 4
        %v1630 = vadd.f32 %v1168, %v1629
        %v1631 = vrot.slane %v1630, 2
        %v1632 = vadd.f32 %v1630, %v1631
        %v1633 = vrot.slane %v1632, 1
        %v1634 = vadd.f32 %v1632, %v1633
        %v1635 = vrot.slane %v1170, 4
        %v1636 = vadd.f32 %v1170, %v1635
        %v1637 = vrot.slane %v1636, 2
        %v1638 = vadd.f32 %v1636, %v1637
        %v1639 = vrot.slane %v1638, 1
        %v1640 = vadd.f32 %v1638, %v1639
        %v1641 = vrot.slane %v1172, 4
        %v1642 = vadd.f32 %v1172, %v1641
        %v1643 = vrot.slane %v1642, 2
        %v1644 = vadd.f32 %v1642, %v1643
        %v1645 = vrot.slane %v1644, 1
        %v1646 = vadd.f32 %v1644, %v1645
        %v1647 = vrot.slane %v1174, 4
        %v1648 = vadd.f32 %v1174, %v1647
        %v1649 = vrot.slane %v1648, 2
        %v1650 = vadd.f32 %v1648, %v1649
        %v1651 = vrot.slane %v1650, 1
        %v1652 = vadd.f32 %v1650, %v1651
        %v1653 = vrot.slane %v1176, 4
        %v1654 = vadd.f32 %v1176, %v1653
        %v1655 = vrot.slane %v1654, 2
        %v1656 = vadd.f32 %v1654, %v1655
        %v1657 = vrot.slane %v1656, 1
        %v1658 = vadd.f32 %v1656, %v1657
        %v1659 = vrot.slane %v1178, 4
        %v1660 = vadd.f32 %v1178, %v1659
        %v1661 = vrot.slane %v1660, 2
        %v1662 = vadd.f32 %v1660, %v1661
        %v1663 = vrot.slane %v1662, 1
        %v1664 = vadd.f32 %v1662, %v1663
        %v1665 = vrot.slane %v1180, 4
        %v1666 = vadd.f32 %v1180, %v1665
        %v1667 = vrot.slane %v1666, 2
        %v1668 = vadd.f32 %v1666, %v1667
        %v1669 = vrot.slane %v1668, 1
        %v1670 = vadd.f32 %v1668, %v1669
        %v1671 = vrot.slane %v1182, 4
        %v1672 = vadd.f32 %v1182, %v1671
        %v1673 = vrot.slane %v1672, 2
        %v1674 = vadd.f32 %v1672, %v1673
        %v1675 = vrot.slane %v1674, 1
        %v1676 = vadd.f32 %v1674, %v1675
        %v1677 = vrot.slane %v1184, 4
        %v1678 = vadd.f32 %v1184, %v1677
        %v1679 = vrot.slane %v1678, 2
        %v1680 = vadd.f32 %v1678, %v1679
        %v1681 = vrot.slane %v1680, 1
        %v1682 = vadd.f32 %v1680, %v1681
        %v1683 = vrot.slane %v1186, 4
        %v1684 = vadd.f32 %v1186, %v1683
        %v1685 = vrot.slane %v1684, 2
        %v1686 = vadd.f32 %v1684, %v1685
        %v1687 = vrot.slane %v1686, 1
        %v1688 = vadd.f32 %v1686, %v1687
        %v1689 = vrot.slane %v1188, 4
        %v1690 = vadd.f32 %v1188, %v1689
        %v1691 = vrot.slane %v1690, 2
        %v1692 = vadd.f32 %v1690, %v1691
        %v1693 = vrot.slane %v1692, 1
        %v1694 = vadd.f32 %v1692, %v1693
        %v1695 = vrot.slane %v1190, 4
        %v1696 = vadd.f32 %v1190, %v1695
        %v1697 = vrot.slane %v1696, 2
        %v1698 = vadd.f32 %v1696, %v1697
        %v1699 = vrot.slane %v1698, 1
        %v1700 = vadd.f32 %v1698, %v1699
        %v1701 = vrot.slane %v1192, 4
        %v1702 = vadd.f32 %v1192, %v1701
        %v1703 = vrot.slane %v1702, 2
        %v1704 = vadd.f32 %v1702, %v1703
        %v1705 = vrot.slane %v1704, 1
        %v1706 = vadd.f32 %v1704, %v1705
        %v1707 = vrot.slane %v1194, 4
        %v1708 = vadd.f32 %v1194, %v1707
        %v1709 = vrot.slane %v1708, 2
        %v1710 = vadd.f32 %v1708, %v1709
        %v1711 = vrot.slane %v1710, 1
        %v1712 = vadd.f32 %v1710, %v1711
        %v1713 = vrot.slane %v1196, 4
        %v1714 = vadd.f32 %v1196, %v1713
        %v1715 = vrot.slane %v1714, 2
        %v1716 = vadd.f32 %v1714, %v1715
        %v1717 = vrot.slane %v1716, 1
        %v1718 = vadd.f32 %v1716, %v1717
        %v1719 = vrot.slane %v1198, 4
        %v1720 = vadd.f32 %v1198, %v1719
        %v1721 = vrot.slane %v1720, 2
        %v1722 = vadd.f32 %v1720, %v1721
        %v1723 = vrot.slane %v1722, 1
        %v1724 = vadd.f32 %v1722, %v1723
        %v1725 = vrot.slane %v1200, 4
        %v1726 = vadd.f32 %v1200, %v1725
        %v1727 = vrot.slane %v1726, 2
        %v1728 = vadd.f32 %v1726, %v1727
        %v1729 = vrot.slane %v1728, 1
        %v1730 = vadd.f32 %v1728, %v1729
        %v1731 = vrot.slane %v1202, 4
        %v1732 = vadd.f32 %v1202, %v1731
        %v1733 = vrot.slane %v1732, 2
        %v1734 = vadd.f32 %v1732, %v1733
        %v1735 = vrot.slane %v1734, 1
        %v1736 = vadd.f32 %v1734, %v1735
        %v1737 = vrot.slane %v1204, 4
        %v1738 = vadd.f32 %v1204, %v1737
        %v1739 = vrot.slane %v1738, 2
        %v1740 = vadd.f32 %v1738, %v1739
        %v1741 = vrot.slane %v1740, 1
        %v1742 = vadd.f32 %v1740, %v1741
        %v1743 = vrot.slane %v1206, 4
        %v1744 = vadd.f32 %v1206, %v1743
        %v1745 = vrot.slane %v1744, 2
        %v1746 = vadd.f32 %v1744, %v1745
        %v1747 = vrot.slane %v1746, 1
        %v1748 = vadd.f32 %v1746, %v1747
        %v1749 = vrot.slane %v1208, 4
        %v1750 = vadd.f32 %v1208, %v1749
        %v1751 = vrot.slane %v1750, 2
        %v1752 = vadd.f32 %v1750, %v1751
        %v1753 = vrot.slane %v1752, 1
        %v1754 = vadd.f32 %v1752, %v1753
        %v1755 = vrot.slane %v1210, 4
        %v1756 = vadd.f32 %v1210, %v1755
        %v1757 = vrot.slane %v1756, 2
        %v1758 = vadd.f32 %v1756, %v1757
        %v1759 = vrot.slane %v1758, 1
        %v1760 = vadd.f32 %v1758, %v1759
        %v1761 = vrot.slane %v1212, 4
        %v1762 = vadd.f32 %v1212, %v1761
        %v1763 = vrot.slane %v1762, 2
        %v1764 = vadd.f32 %v1762, %v1763
        %v1765 = vrot.slane %v1764, 1
        %v1766 = vadd.f32 %v1764, %v1765
        %v1767 = vrot.slane %v1214, 4
        %v1768 = vadd.f32 %v1214, %v1767
        %v1769 = vrot.slane %v1768, 2
        %v1770 = vadd.f32 %v1768, %v1769
        %v1771 = vrot.slane %v1770, 1
        %v1772 = vadd.f32 %v1770, %v1771
        %v1773 = vrot.slane %v1216, 4
        %v1774 = vadd.f32 %v1216, %v1773
        %v1775 = vrot.slane %v1774, 2
        %v1776 = vadd.f32 %v1774, %v1775
        %v1777 = vrot.slane %v1776, 1
        %v1778 = vadd.f32 %v1776, %v1777
        %v1779 = vrot.slane %v1218, 4
        %v1780 = vadd.f32 %v1218, %v1779
        %v1781 = vrot.slane %v1780, 2
        %v1782 = vadd.f32 %v1780, %v1781
        %v1783 = vrot.slane %v1782, 1
        %v1784 = vadd.f32 %v1782, %v1783
        %v1785 = vrot.slane %v1220, 4
        %v1786 = vadd.f32 %v1220, %v1785
        %v1787 = vrot.slane %v1786, 2
        %v1788 = vadd.f32 %v1786, %v1787
        %v1789 = vrot.slane %v1788, 1
        %v1790 = vadd.f32 %v1788, %v1789
        %v1791 = vrot.slane %v1222, 4
        %v1792 = vadd.f32 %v1222, %v1791
        %v1793 = vrot.slane %v1792, 2
        %v1794 = vadd.f32 %v1792, %v1793
        %v1795 = vrot.slane %v1794, 1
        %v1796 = vadd.f32 %v1794, %v1795
        %v1797 = vrot.slane %v1224, 4
        %v1798 = vadd.f32 %v1224, %v1797
        %v1799 = vrot.slane %v1798, 2
        %v1800 = vadd.f32 %v1798, %v1799
        %v1801 = vrot.slane %v1800, 1
        %v1802 = vadd.f32 %v1800, %v1801
        %v1803 = vrot.slane %v1226, 4
        %v1804 = vadd.f32 %v1226, %v1803
        %v1805 = vrot.slane %v1804, 2
        %v1806 = vadd.f32 %v1804, %v1805
        %v1807 = vrot.slane %v1806, 1
        %v1808 = vadd.f32 %v1806, %v1807
        %v1809 = vrot.slane %v1228, 4
        %v1810 = vadd.f32 %v1228, %v1809
        %v1811 = vrot.slane %v1810, 2
        %v1812 = vadd.f32 %v1810, %v1811
        %v1813 = vrot.slane %v1812, 1
        %v1814 = vadd.f32 %v1812, %v1813
        %v1815 = vrot.slane %v1230, 4
        %v1816 = vadd.f32 %v1230, %v1815
        %v1817 = vrot.slane %v1816, 2
        %v1818 = vadd.f32 %v1816, %v1817
        %v1819 = vrot.slane %v1818, 1
        %v1820 = vadd.f32 %v1818, %v1819
        %v1821 = vrot.slane %v1232, 4
        %v1822 = vadd.f32 %v1232, %v1821
        %v1823 = vrot.slane %v1822, 2
        %v1824 = vadd.f32 %v1822, %v1823
        %v1825 = vrot.slane %v1824, 1
        %v1826 = vadd.f32 %v1824, %v1825
        %v1827 = vmul.f32 %v1448, 0.125
        %v1828 = vmul.f32 %v1454, 0.125
        %v1829 = vmul.f32 %v1460, 0.125
        %v1830 = vmul.f32 %v1466, 0.125
        %v1831 = vmul.f32 %v1472, 0.125
        %v1832 = vmul.f32 %v1478, 0.125
        %v1833 = vmul.f32 %v1484, 0.125
        %v1834 = vmul.f32 %v1490, 0.125
        %v1835 = vmul.f32 %v1496, 0.125
        %v1836 = vmul.f32 %v1502, 0.125
        %v1837 = vmul.f32 %v1508, 0.125
        %v1838 = vmul.f32 %v1514, 0.125
        %v1839 = vmul.f32 %v1520, 0.125
        %v1840 = vmul.f32 %v1526, 0.125
        %v1841 = vmul.f32 %v1532, 0.125
        %v1842 = vmul.f32 %v1538, 0.125
        %v1843 = vmul.f32 %v1544, 0.125
        %v1844 = vmul.f32 %v1550, 0.125
        %v1845 = vmul.f32 %v1556, 0.125
        %v1846 = vmul.f32 %v1562, 0.125
        %v1847 = vmul.f32 %v1568, 0.125
        %v1848 = vmul.f32 %v1574, 0.125
        %v1849 = vmul.f32 %v1580, 0.125
        %v1850 = vmul.f32 %v1586, 0.125
        %v1851 = vmul.f32 %v1592, 0.125
        %v1852 = vmul.f32 %v1598, 0.125
        %v1853 = vmul.f32 %v1604, 0.125
        %v1854 = vmul.f32 %v1610, 0.125
        %v1855 = vmul.f32 %v1616, 0.125
        %v1856 = vmul.f32 %v1622, 0.125
        %v1857 = vmul.f32 %v1628, 0.125
        %v1858 = vmul.f32 %v1634, 0.125
        %v1859 = vmul.f32 %v1640, 0.125
        %v1860 = vmul.f32 %v1646, 0.125
        %v1861 = vmul.f32 %v1652, 0.125
        %v1862 = vmul.f32 %v1658, 0.125
        %v1863 = vmul.f32 %v1664, 0.125
        %v1864 = vmul.f32 %v1670, 0.125
        %v1865 = vmul.f32 %v1676, 0.125
        %v1866 = vmul.f32 %v1682, 0.125
        %v1867 = vmul.f32 %v1688, 0.125
        %v1868 = vmul.f32 %v1694, 0.125
        %v1869 = vmul.f32 %v1700, 0.125
        %v1870 = vmul.f32 %v1706, 0.125
        %v1871 = vmul.f32 %v1712, 0.125
        %v1872 = vmul.f32 %v1718, 0.125
        %v1873 = vmul.f32 %v1724, 0.125
        %v1874 = vmul.f32 %v1730, 0.125
        %v1875 = vmul.f32 %v1736, 0.125
        %v1876 = vmul.f32 %v1742, 0.125
        %v1877 = vmul.f32 %v1748, 0.125
        %v1878 = vmul.f32 %v1754, 0.125
        %v1879 = vmul.f32 %v1760, 0.125
        %v1880 = vmul.f32 %v1766, 0.125
        %v1881 = vmul.f32 %v1772, 0.125
        %v1882 = vmul.f32 %v1778, 0.125
        %v1883 = vmul.f32 %v1784, 0.125
        %v1884 = vmul.f32 %v1790, 0.125
        %v1885 = vmul.f32 %v1796, 0.125
        %v1886 = vmul.f32 %v1802, 0.125
        %v1887 = vmul.f32 %v1808, 0.125
        %v1888 = vmul.f32 %v1814, 0.125
        %v1889 = vmul.f32 %v1820, 0.125
        %v1890 = vmul.f32 %v1826, 0.125
        %vm1955 = vcmask 1041409
        %v1956 = vsel %vm1955, %v1828, %v1827
        %vm1957 = vcmask 1042434
        %v1958 = vsel %vm1957, %v1829, %v1956
        %vm1959 = vcmask 1043459
        %v1960 = vsel %vm1959, %v1830, %v1958
        %vm1961 = vcmask 1044484
        %v1962 = vsel %vm1961, %v1831, %v1960
        %vm1963 = vcmask 1045509
        %v1964 = vsel %vm1963, %v1832, %v1962
        %vm1965 = vcmask 1046534
        %v1966 = vsel %vm1965, %v1833, %v1964
        %vm1967 = vcmask 1047559
        %v1968 = vsel %vm1967, %v1834, %v1966
        %v1969 = vsel %vm1955, %v1836, %v1835
        %v1970 = vsel %vm1957, %v1837, %v1969
        %v1971 = vsel %vm1959, %v1838, %v1970
        %v1972 = vsel %vm1961, %v1839, %v1971
        %v1973 = vsel %vm1963, %v1840, %v1972
        %v1974 = vsel %vm1965, %v1841, %v1973
        %v1975 = vsel %vm1967, %v1842, %v1974
        %v1976 = vsel %vm1955, %v1844, %v1843
        %v1977 = vsel %vm1957, %v1845, %v1976
        %v1978 = vsel %vm1959, %v1846, %v1977
        %v1979 = vsel %vm1961, %v1847, %v1978
        %v1980 = vsel %vm1963, %v1848, %v1979
        %v1981 = vsel %vm1965, %v1849, %v1980
        %v1982 = vsel %vm1967, %v1850, %v1981
        %v1983 = vsel %vm1955, %v1852, %v1851
        %v1984 = vsel %vm1957, %v1853, %v1983
        %v1985 = vsel %vm1959, %v1854, %v1984
        %v1986 = vsel %vm1961, %v1855, %v1985
        %v1987 = vsel %vm1963, %v1856, %v1986
        %v1988 = vsel %vm1965, %v1857, %v1987
        %v1989 = vsel %vm1967, %v1858, %v1988
        %v1990 = vsel %vm1955, %v1860, %v1859
        %v1991 = vsel %vm1957, %v1861, %v1990
        %v1992 = vsel %vm1959, %v1862, %v1991
        %v1993 = vsel %vm1961, %v1863, %v1992
        %v1994 = vsel %vm1963, %v1864, %v1993
        %v1995 = vsel %vm1965, %v1865, %v1994
        %v1996 = vsel %vm1967, %v1866, %v1995
        %v1997 = vsel %vm1955, %v1868, %v1867
        %v1998 = vsel %vm1957, %v1869, %v1997
        %v1999 = vsel %vm1959, %v1870, %v1998
        %v2000 = vsel %vm1961, %v1871, %v1999
        %v2001 = vsel %vm1963, %v1872, %v2000
        %v2002 = vsel %vm1965, %v1873, %v2001
        %v2003 = vsel %vm1967, %v1874, %v2002
        %v2004 = vsel %vm1955, %v1876, %v1875
        %v2005 = vsel %vm1957, %v1877, %v2004
        %v2006 = vsel %vm1959, %v1878, %v2005
        %v2007 = vsel %vm1961, %v1879, %v2006
        %v2008 = vsel %vm1963, %v1880, %v2007
        %v2009 = vsel %vm1965, %v1881, %v2008
        %v2010 = vsel %vm1967, %v1882, %v2009
        %v2011 = vsel %vm1955, %v1884, %v1883
        %v2012 = vsel %vm1957, %v1885, %v2011
        %v2013 = vsel %vm1959, %v1886, %v2012
        %v2014 = vsel %vm1961, %v1887, %v2013
        %v2015 = vsel %vm1963, %v1888, %v2014
        %v2016 = vsel %vm1965, %v1889, %v2015
        %v2017 = vsel %vm1967, %v1890, %v2016
        %2026 = vst.msk [vmem:[%s281] sm:$0xff] %vm1106, %v1968
        %2027 = vst.msk [vmem:[%s281 + $0x8] sm:$0xff] %vm1106, %v1975
        %2028 = vst.msk [vmem:[%s281 + $0x10] sm:$0xff] %vm1106, %v1982
        %2029 = vst.msk [vmem:[%s281 + $0x18] sm:$0xff] %vm1106, %v1989
        %2030 = vst.msk [vmem:[%s281 + $0x20] sm:$0xff] %vm1106, %v1996
        %2031 = vst.msk [vmem:[%s281 + $0x28] sm:$0xff] %vm1106, %v2003
        %2032 = vst.msk [vmem:[%s281 + $0x30] sm:$0xff] %vm1106, %v2010
        %2033 = vst.msk [vmem:[%s281 + $0x38] sm:$0xff] %vm1106, %v2017
        %s2034 = smul.u32 8, %s28
        %p2035 = scmp.lt.s32.totalorder %s27, 1
        %s2036 = scalar_select %p2035, %s27, 1
        %p2037 = scmp.lt.s32.totalorder %s2034, 7
        %s2038 = scalar_select %p2037, %s2034, 7
        %s2039 = smul.addr %s2036, 8
        %s2040 = sadd.s32 %s2038, %s2039
        %s2041 = smul.addr %s2040, 8
        %s2042 = scalar_lea.vmem %s3, %s2041
        %s2043 = sand.u32 %s141, 1
        %s2044 = scalar_lea.sflag [#allocation3], %s2043
        %s2045 = sand.u32 %s141, 1
        %s2046 = scalar_lea.vmem [#allocation2], %s2045
        %s2047 = sand.u32 %s167, 1
        %s2048 = scalar_lea.sflag [#allocation5], %s2047
        %s2049 = sand.u32 %s167, 1
        %s2050 = scalar_lea.vmem [#allocation4], %s2049
        // Predicated region
        $region37: #{tpu_custom_call.1} parent=31 // pred_check
          %p2051 = pneg %p125
        $region38: #{tpu_custom_call.1} parent=31 // pred_check_branch
          %2053 = sbr.rel (%p2051) target = $region40
        $region39: #{tpu_custom_call.1} parent=31 // pred_region
          %s2054 = smul.u32 8, %s28
        $region40: #{tpu_custom_call.1} parent=31 // pred_fallthru
          _
        // Predicated region
        $region41: #{tpu_custom_call.1} parent=31 // pred_check
          %p2055 = pneg %p151
        $region42: #{tpu_custom_call.1} parent=31 // pred_check_branch
          %2057 = sbr.rel (%p2055) target = $region44
        $region43: #{tpu_custom_call.1} parent=31 // pred_region
          %s2059 = ssub.s32 16, 16
          %2060 = vsyncadd %s2044, %s2059
          %s2061 = smul.addr %s27, 16
          %s2062 = scalar_lea.hbm %s4, %s2061
          %s2064 = sshll.u32 %s2046, 4
          %s2065 = int_to_ptr.vmem [resolvable:$true] %s2064
          %2067 = dma.vmem_to_hbm [thread:$0]  %s2065, 16, %s2062, %s2044
        $region44: #{tpu_custom_call.1} parent=31 // pred_fallthru
          _
        // Predicated region
        $region45: #{tpu_custom_call.1} parent=31 // pred_check
          %p2068 = pneg %p177
        $region46: #{tpu_custom_call.1} parent=31 // pred_check_branch
          %2070 = sbr.rel (%p2068) target = $region48
        $region47: #{tpu_custom_call.1} parent=31 // pred_region
          %s2072 = ssub.s32 16, 16
          %2073 = vsyncadd %s2048, %s2072
          %s2074 = smul.addr %s27, 16
          %s2075 = scalar_lea.hbm %s5, %s2074
          %s2077 = sshll.u32 %s2050, 4
          %s2078 = int_to_ptr.vmem [resolvable:$true] %s2077
          %2080 = dma.vmem_to_hbm [thread:$0]  %s2078, 16, %s2075, %s2048
        $region48: #{tpu_custom_call.1} parent=31 // pred_fallthru
          _
      $region32: #{tpu_custom_call.1} parent=5 // pred_fallthru
        _
      %p2081 = scmp.le.s32.totalorder 2, %s18
      // Predicated region
      $region49: #{tpu_custom_call.1} parent=5 // pred_check
        %p2082 = pneg %p2081
      $region50: #{tpu_custom_call.1} parent=5 // pred_check_branch
        %2084 = sbr.rel (%p2082) target = $region52
      $region51: #{tpu_custom_call.1} parent=5 // pred_region
        %s2085 = ssub.s32 %s18, 2
        // Predicated region
        $region53: #{tpu_custom_call.1} parent=51 // pred_check
          %p2086 = pneg %p131
        $region54: #{tpu_custom_call.1} parent=51 // pred_check_branch
          %2088 = sbr.rel (%p2086) target = $region56
        $region55: #{tpu_custom_call.1} parent=51 // pred_region
          %s2089 = smul.u32 8, %s30
          %p2090 = scmp.lt.s32.totalorder %s29, 1
          %s2091 = scalar_select %p2090, %s29, 1
          %p2092 = scmp.lt.s32.totalorder %s2089, 7
          %s2093 = scalar_select %p2092, %s2089, 7
          %s2094 = smul.addr %s2091, 8
          %s2095 = sadd.s32 %s2093, %s2094
          %s2096 = smul.addr %s2095, 8
          %s2097 = scalar_lea.vmem %s3, %s2096
        $region56: #{tpu_custom_call.1} parent=51 // pred_fallthru
          _
        // Predicated region
        $region57: #{tpu_custom_call.1} parent=51 // pred_check
          %p2098 = pneg %p157
        $region58: #{tpu_custom_call.1} parent=51 // pred_check_branch
          %2100 = sbr.rel (%p2098) target = $region60
        $region59: #{tpu_custom_call.1} parent=51 // pred_region
          %s2101 = sand.u32 %s142, 1
          %s2102 = scalar_lea.sflag [#allocation3], %s2101
          %s2103 = sand.u32 %s142, 1
          %s2104 = scalar_lea.vmem [#allocation2], %s2103
          %2105 = dma.done %s2102, 16
        $region60: #{tpu_custom_call.1} parent=51 // pred_fallthru
          _
        // Predicated region
        $region61: #{tpu_custom_call.1} parent=51 // pred_check
          %p2106 = pneg %p183
        $region62: #{tpu_custom_call.1} parent=51 // pred_check_branch
          %2108 = sbr.rel (%p2106) target = $region64
        $region63: #{tpu_custom_call.1} parent=51 // pred_region
          %s2109 = sand.u32 %s168, 1
          %s2110 = scalar_lea.sflag [#allocation5], %s2109
          %s2111 = sand.u32 %s168, 1
          %s2112 = scalar_lea.vmem [#allocation4], %s2111
          %2113 = dma.done %s2110, 16
        $region64: #{tpu_custom_call.1} parent=51 // pred_fallthru
          _
      $region52: #{tpu_custom_call.1} parent=5 // pred_fallthru
        _
    $region6: #{tpu_custom_call.1} parent=1 // loop_footer
      %s22 = sadd.s32 1, %s18
    $region7: #{tpu_custom_call.1} parent=1 // loop_footer_branch
      %17 = sbr.rel target = $region3
    $region8: #{tpu_custom_call.1} parent=1 // loop_exit
      _
    %2114 = vsyncpa [#allocation3], 1
    %s2115 = scalar_lea.sflag [#allocation3], 1
    %2116 = vsyncpa %s2115, 1
    %2117 = vsyncpa [#allocation5], 1
    %s2118 = scalar_lea.sflag [#allocation5], 1
    %2119 = vsyncpa %s2118, 1

</llo_original>
